<compile_context>
chip_gen: v5e
topology: v5e:2x2
jax: 0.10.0
libtpu: 0.0.40
codegen_flags: <defaults>
</compile_context>

<pallas_src>
import math
from functools import partial

import jax
import jax.numpy as jnp
import numpy as np
from jax import lax
from jax.experimental import pallas as pl
from jax.experimental.pallas import tpu as pltpu


def _round_up(n, m):
    return ((n + m - 1) // m) * m


PARAM_ORDER = ("wk", "bk", "wv", "bv", "wo", "bo",
               "g1", "beta1", "w1", "b1", "w2", "b2", "g2", "beta2")


# ----------------------------- Pallas kernel --------------------------------
def _fused_stack_kernel(x_ref, y_ref,
                        wk_ref, bk_ref, wv_ref, bv_ref,
                        wo_ref, bo_ref,
                        g1_ref, beta1_ref,
                        w1_ref, b1_ref, w2_ref, b2_ref,
                        g2_ref, beta2_ref,
                        o_ref,
                        ctx_ref,
                        *, n_heads, d_k, d_hp, d_model, d_pad, tb, seq):
    Dp = d_pad
    R = tb * seq
    layer = pl.program_id(1)

    # Layer 0: seed the carried activation.  o_ref's block index is constant
    # over the (innermost, "arbitrary") layer axis, so its VMEM buffer is
    # resident across layers and only written back to HBM when the batch-tile
    # index changes.
    @pl.when(layer == 0)
    def _():
        o_ref[...] = x_ref[...]

    x_bf = o_ref[...].reshape(R, Dp)              # bf16 carried activation
    y_bf = y_ref[...].reshape(R, Dp)              # bf16 value input (constant across layers)
    x_f32 = x_bf.astype(jnp.float32)              # single f32 copy: residual + LayerNorm only

    # ---- projections: bf16 operands straight from refs, f32 accumulation ----
    # kq_same=True in the reference: q and k are the same projection of x.
    q = jnp.dot(x_bf, wk_ref[0], preferred_element_type=jnp.float32) + bk_ref[0]  # (R, Dq)
    v = jnp.dot(y_bf, wv_ref[0], preferred_element_type=jnp.float32) + bv_ref[0]  # (R, Dq)

    Dq = n_heads * d_hp
    k_b = q.astype(jnp.bfloat16).reshape(tb, seq, Dq)            # keys (= unscaled q)
    scale_bf = jnp.asarray(1.0 / math.sqrt(d_k), dtype=jnp.bfloat16)
    q_b = k_b * scale_bf                                         # scaled queries (one cast saved)
    v_b = v.astype(jnp.bfloat16).reshape(tb, seq, Dq)

    row = lax.broadcasted_iota(jnp.int32, (seq, seq), 0)
    col = lax.broadcasted_iota(jnp.int32, (seq, seq), 1)
    keep = (col < row)[None]        # strict causal: (triu(ones, k=0) == 0)
    not_first = (row > 0)[None]     # zero_pad: zero the first query row

    # ---- attention: 128-lane-aligned head slabs, context into VMEM scratch ---
    for h in range(n_heads):
        sl = slice(h * d_hp, (h + 1) * d_hp)      # whole-vreg lane slab
        s = jnp.einsum('bqd,bkd->bqk', q_b[:, :, sl], k_b[:, :, sl],
                       preferred_element_type=jnp.float32)
        s = jnp.where(keep, s, jnp.float32(-1e32))
        m = jnp.max(s, axis=-1, keepdims=True)
        e = jnp.exp(s - m)
        inv = pl.reciprocal(jnp.sum(e, axis=-1, keepdims=True), approx=True)
        p = jnp.where(not_first, e * inv, jnp.float32(0.0)).astype(jnp.bfloat16)
        ctx_h = jnp.einsum('bqk,bkd->bqd', p, v_b[:, :, sl],
                           preferred_element_type=jnp.float32)
        ctx_ref[:, sl] = ctx_h.reshape(R, d_hp).astype(jnp.bfloat16)

    # ---- ONE full-depth output projection (contraction over all Dq lanes) ----
    attn = jnp.dot(ctx_ref[...], wo_ref[0],
                   preferred_element_type=jnp.float32) + bo_ref[0]            # (R, Dp)

    # ---- residual + LayerNorm over the true d_model lanes (pad lanes zero) ---
    lane = lax.broadcasted_iota(jnp.int32, (1, Dp), 1)
    feat = lane < d_model
    inv_d = 1.0 / d_model

    def layernorm(z, g, b):
        mu = jnp.sum(z, axis=-1, keepdims=True) * inv_d       # pad lanes are zero
        zc = jnp.where(feat, z - mu, jnp.float32(0.0))
        var = jnp.sum(zc * zc, axis=-1, keepdims=True) * inv_d
        return zc * lax.rsqrt(var + 1e-5) * g + b             # pad lanes: g=b=0

    x1 = layernorm(x_f32 + attn, g1_ref[0], beta1_ref[0])

    # ---- FFN ----
    h1 = jnp.maximum(
        jnp.dot(x1.astype(jnp.bfloat16), w1_ref[0],
                preferred_element_type=jnp.float32) + b1_ref[0],
        jnp.float32(0.0))
    ff = jnp.dot(h1.astype(jnp.bfloat16), w2_ref[0],
                 preferred_element_type=jnp.float32) + b2_ref[0]
    x2 = layernorm(x1 + ff, g2_ref[0], beta2_ref[0])

    # Write back the carried activation (HBM writeback only after the last layer).
    o_ref[...] = x2.reshape(tb, seq, Dp).astype(o_ref.dtype)


# --------------------------- sizing heuristics -------------------------------
def _vmem_limit_bytes():
    """~72% of per-core VMEM (v7x: ~46 MiB of 64; v5e/v6e: ~92 MiB of 128)."""
    cap = 128 * 1024 * 1024
    try:
        info = pltpu.get_tpu_info()
        cap = getattr(info, "vmem_capacity_bytes", cap) or cap
    except Exception:
        pass
    return min(int(0.72 * cap), 100 * 1024 * 1024)


def _kernel_vmem_estimate(tb, seq, d_pad, d_q, f_pad):
    """Rough upper bound on live VMEM for one grid step (bytes)."""
    R = tb * seq
    s_l = max(seq, 128)                                  # lane-padded score key axis
    est = 3 * 2 * tb * seq * d_pad * 2                   # x / y / out blocks, 2x-buffered bf16
    est += 4 * (3 * d_pad * d_q + 2 * d_pad * f_pad)     # wk,wv,wo,w1,w2 bf16, 2x-buffered
    est += 8 * (2 * d_q + 6 * d_pad + f_pad)             # biases / LN params f32, 2x-buffered
    est += 2 * R * d_q * 4 + 3 * R * d_q * 2             # q,v f32 + q/k/v bf16 copies
    est += R * d_q * 2                                   # ctx scratch bf16
    est += 5 * R * d_pad * 4                             # x_f32, attn, x1, ff, x2 (f32)
    est += 3 * tb * seq * s_l * 4                        # s / e / p blocks (one head live)
    est += R * f_pad * 6                                 # FFN hidden f32 + bf16 operand
    return est


def _pick_batch_tile(batch, seq, d_pad, d_q, f_pad, vmem_budget):
    divisors = [t for t in range(1, batch + 1) if batch % t == 0]
    feasible = [t for t in divisors
                if _kernel_vmem_estimate(t, seq, d_pad, d_q, f_pad) <= vmem_budget]
    if not feasible:
        feasible = [1]

    def score(t):
        rows = t * seq
        return ((batch // t) >= 2,      # >=2 parallel grid steps (v7x: 2 TensorCores)
                rows % 256 == 0,        # MXU row fill, v6e/v7x (2x256^2)
                rows % 128 == 0,        # MXU row fill, v5e (4x128^2)
                t)                      # then largest tile (amortize ~0.35us/step)
    return max(feasible, key=score)


# ------------------------------- wrapper -------------------------------------
def transformer_stack(x, y, stacked_params, *, n_heads, d_model,
                      batch_tile=None, vmem_limit=None):
    """Run the full stack of TransformerLayers in one pallas_call.

    x, y: (B, S, Dp) bf16 padded query/key and value inputs.
    stacked_params: dict of (n_layers, ...) padded parameter arrays.
    """
    B, S, Dp = x.shape
    n_layers = stacked_params["wk"].shape[0]
    Dq = stacked_params["wk"].shape[2]
    Fp = stacked_params["w1"].shape[2]
    assert stacked_params["wk"].shape[1] == Dp and Dq % n_heads == 0
    d_k = d_model // n_heads
    d_hp = Dq // n_heads

    if vmem_limit is None:
        vmem_limit = _vmem_limit_bytes()
    if batch_tile is None:
        batch_tile = _pick_batch_tile(B, S, Dp, Dq, Fp, vmem_limit)
    assert B % batch_tile == 0
    tb = batch_tile
    R = tb * S

    plist = [stacked_params[name] for name in PARAM_ORDER]
    kernel = partial(_fused_stack_kernel, n_heads=n_heads, d_k=d_k, d_hp=d_hp,
                     d_model=d_model, d_pad=Dp, tb=tb, seq=S)

    act_spec = pl.BlockSpec((tb, S, Dp), lambda b, l: (b, 0, 0))

    def layer_spec(arr):            # (L, rows, cols) -> one layer's slice per step
        return pl.BlockSpec((1,) + arr.shape[1:], lambda b, l: (l, 0, 0))

    return pl.pallas_call(
        kernel,
        out_shape=jax.ShapeDtypeStruct((B, S, Dp), jnp.bfloat16),
        grid_spec=pltpu.PrefetchScalarGridSpec(
            num_scalar_prefetch=0,
            # Layer axis MUST be innermost: the output block (the layer carry)
            # is revisited across it and only flushed when the batch tile changes.
            grid=(B // tb, n_layers),
            in_specs=[act_spec, act_spec] + [layer_spec(p) for p in plist],
            out_specs=pl.BlockSpec((tb, S, Dp), lambda b, l: (b, 0, 0)),
            scratch_shapes=[pltpu.VMEM((R, Dq), jnp.bfloat16)],   # per-head ctx slabs
        ),
        compiler_params=pltpu.CompilerParams(
            dimension_semantics=("parallel", "arbitrary"),
            vmem_limit_bytes=vmem_limit),
    )(x, y, *plist)


# ------------------------- parameter construction ---------------------------
def cosine_positional_embedding(max_len, d_model):
    # Even d_model => the 0.1*randn init is fully overwritten by sin/cos.
    pos = jnp.arange(max_len, dtype=jnp.float32)[:, None]
    div = jnp.exp(jnp.arange(0, d_model, 2, dtype=jnp.float32)
                  * (-(math.log(10000.0) / d_model)))
    ang = pos * div
    pe = jnp.zeros((max_len, d_model), dtype=jnp.float32)
    pe = pe.at[:, 0::2].set(jnp.sin(ang))
    pe = pe.at[:, 1::2].set(jnp.cos(ang))
    return pe[None]                                   # (1, max_len, d_model)


def init_block_params(key, d_model, d_ff):
    ks = jax.random.split(key, 6)

    def xavier(k, fan_in, fan_out):
        bound = math.sqrt(6.0 / (fan_in + fan_out))
        return jax.random.uniform(k, (fan_in, fan_out), jnp.float32,
                                  -bound, bound)

    def torch_linear(kw, kb, fan_in, fan_out):
        bound = 1.0 / math.sqrt(fan_in)
        w = jax.random.uniform(kw, (fan_in, fan_out), jnp.float32, -bound, bound)
        b = jax.random.uniform(kb, (1, fan_out), jnp.float32, -bound, bound)
        return w, b

    w1, b1 = torch_linear(ks[3], ks[4], d_model, d_ff)
    w2, b2 = torch_linear(ks[5], ks[0], d_ff, d_model)
    return {
        "wk": xavier(ks[0], d_model, d_model),
        "bk": jnp.zeros((1, d_model), jnp.float32),
        "wv": xavier(ks[1], d_model, d_model),
        "bv": jnp.zeros((1, d_model), jnp.float32),
        "wo": xavier(ks[2], d_model, d_model),
        "bo": jnp.zeros((1, d_model), jnp.float32),
        "g1": jnp.ones((1, d_model), jnp.float32),
        "beta1": jnp.zeros((1, d_model), jnp.float32),
        "w1": w1, "b1": b1, "w2": w2, "b2": b2,
        "g2": jnp.ones((1, d_model), jnp.float32),
        "beta2": jnp.zeros((1, d_model), jnp.float32),
    }


def pad_block_params(p, d_model, n_heads, d_ff):
    """Pad params to lane-dense shapes; cast weight matrices to bf16.

    Activations use flat padding (true features in lanes [0, d_model)); each
    head occupies a 128-lane-aligned slab of d_hp = round_up(d_k, 128) lanes
    in the q/k/v space (true dims in the first d_k lanes of its slab).  All pad
    rows/columns are zero, so the padded forward equals the unpadded math.
    """
    Dp = _round_up(d_model, 128)
    d_k = d_model // n_heads
    d_hp = _round_up(d_k, 128)
    Dq = n_heads * d_hp
    Fp = _round_up(d_ff, 128)
    bf16 = jnp.bfloat16

    def pad2(w, rows, cols):
        return jnp.zeros((rows, cols), jnp.float32).at[
            :w.shape[0], :w.shape[1]].set(w)

    def head_cols(w):          # (D, D) -> (Dp, Dq): columns head-interleaved
        out = jnp.zeros((Dp, Dq), jnp.float32)
        for h in range(n_heads):
            out = out.at[:d_model, h * d_hp:h * d_hp + d_k].set(
                w[:, h * d_k:(h + 1) * d_k])
        return out

    def head_bias(b):          # (1, D) -> (1, Dq): head-interleaved
        out = jnp.zeros((1, Dq), jnp.float32)
        for h in range(n_heads):
            out = out.at[:, h * d_hp:h * d_hp + d_k].set(
                b[:, h * d_k:(h + 1) * d_k])
        return out

    def head_rows(w):          # (D, D) -> (Dq, Dp): rows head-interleaved
        out = jnp.zeros((Dq, Dp), jnp.float32)
        for h in range(n_heads):
            out = out.at[h * d_hp:h * d_hp + d_k, :d_model].set(
                w[h * d_k:(h + 1) * d_k, :])
        return out

    return {
        "wk": head_cols(p["wk"]).astype(bf16),
        "bk": head_bias(p["bk"]),
        "wv": head_cols(p["wv"]).astype(bf16),
        "bv": head_bias(p["bv"]),
        "wo": head_rows(p["wo"]).astype(bf16),
        "bo": pad2(p["bo"], 1, Dp),
        "g1": pad2(p["g1"], 1, Dp),
        "beta1": pad2(p["beta1"], 1, Dp),
        "w1": pad2(p["w1"], Dp, Fp).astype(bf16),
        "b1": pad2(p["b1"], 1, Fp),
        "w2": pad2(p["w2"], Fp, Dp).astype(bf16),
        "b2": pad2(p["b2"], 1, Dp),
        "g2": pad2(p["g2"], 1, Dp),
        "beta2": pad2(p["beta2"], 1, Dp),
    }


def stack_block_params(padded_list):
    """Stack per-layer padded params along a leading layer axis."""
    return {name: jnp.stack([p[name] for p in padded_list], axis=0)
            for name in PARAM_ORDER}


# ----------------------------- full forward ---------------------------------
def architecture_forward(q_embed, qa_embed, stacked_padded_params, pe, *, n_heads):
    B, S, D = q_embed.shape
    Dp = _round_up(D, 128)
    pos = pe[:, :S, :]                 # CosinePositionalEmbedding.forward
    x = q_embed + pos                  # q_pos_embed
    y = qa_embed + pos                 # qa_pos_embed
    xp = jnp.zeros((B, S, Dp), jnp.float32).at[..., :D].set(x).astype(jnp.bfloat16)
    yp = jnp.zeros((B, S, Dp), jnp.float32).at[..., :D].set(y).astype(jnp.bfloat16)
    out = transformer_stack(xp, yp, stacked_padded_params,
                            n_heads=n_heads, d_model=D)
    return out[..., :D].astype(jnp.float32)


# --------------------------- pure-JAX reference -----------------------------
def _layernorm(x, g, b):
    mu = jnp.mean(x, axis=-1, keepdims=True)
    var = jnp.mean(jnp.square(x - mu), axis=-1, keepdims=True)
    return (x - mu) / jnp.sqrt(var + 1e-5) * g + b


def _ref_block(x, y, p, n_heads):
    B, S, D = x.shape
    d_k = D // n_heads
    q = x @ p["wk"] + p["bk"]
    k = q
    v = y @ p["wv"] + p["bv"]

    def split(t):
        return t.reshape(B, S, n_heads, d_k).transpose(0, 2, 1, 3)

    qh, kh, vh = split(q), split(k), split(v)
    s = jnp.einsum("bhqd,bhkd->bhqk", qh, kh) / math.sqrt(d_k)
    row = lax.broadcasted_iota(jnp.int32, (S, S), 0)
    col = lax.broadcasted_iota(jnp.int32, (S, S), 1)
    s = jnp.where(col < row, s, -1e32)
    prob = jax.nn.softmax(s, axis=-1)
    prob = prob.at[:, :, 0, :].set(0.0)
    o = jnp.einsum("bhqk,bhkd->bhqd", prob, vh).transpose(0, 2, 1, 3)
    o = o.reshape(B, S, D) @ p["wo"] + p["bo"]
    x = _layernorm(x + o, p["g1"], p["beta1"])
    ff = jnp.maximum(x @ p["w1"] + p["b1"], 0.0) @ p["w2"] + p["b2"]
    return _layernorm(x + ff, p["g2"], p["beta2"])


def _ref_forward(q_embed, qa_embed, block_params_list, pe, *, n_heads):
    S = q_embed.shape[1]
    pos = pe[:, :S, :]
    x = q_embed + pos
    y = qa_embed + pos
    for bp in block_params_list:
        x = _ref_block(x, y, bp, n_heads)
    return x


# --------------------------------- main --------------------------------------
if __name__ == "__main__":
    batch, seq, d_model = 2, 8, 32
    n_heads, d_ff, n_blocks, max_len = 2, 64, 2, 64

    key = jax.random.PRNGKey(0)
    k_q, k_qa, k_p = jax.random.split(key, 3)
    q_embed_data = jax.random.normal(k_q, (batch, seq, d_model), jnp.float32)
    qa_embed_data = jax.random.normal(k_qa, (batch, seq, d_model), jnp.float32)

    pe = cosine_positional_embedding(max_len, d_model)
    raw_params = [init_block_params(k, d_model, d_ff)
                  for k in jax.random.split(k_p, n_blocks)]
    padded_params = [pad_block_params(p, d_model, n_heads, d_ff)
                     for p in raw_params]
    stacked_params = stack_block_params(padded_params)

    out = architecture_forward(q_embed_data, qa_embed_data, stacked_params, pe,
                               n_heads=n_heads)
    out = jax.block_until_ready(out)

    ref = _ref_forward(q_embed_data, qa_embed_data, raw_params, pe,
                       n_heads=n_heads)
    # bf16 MXU operands + bf16 inter-layer activations + approx reciprocal
    # => small numeric drift vs the pure-f32 reference.
    np.testing.assert_allclose(np.asarray(out, dtype=np.float32),
                               np.asarray(ref), rtol=1e-1, atol=1e-1)

    print("KERNEL_OK")
</pallas_src>

<mosaic_0001>
module attributes {stable_mosaic.version = 11 : i64} {
  func.func @_fused_stack_kernel(%arg0: i32, %arg1: i32, %arg2: memref<1x8x128xbf16, #tpu.memory_space<vmem>>, %arg3: memref<1x8x128xbf16, #tpu.memory_space<vmem>>, %arg4: memref<1x128x256xbf16, #tpu.memory_space<vmem>>, %arg5: memref<1x1x256xf32, #tpu.memory_space<vmem>>, %arg6: memref<1x128x256xbf16, #tpu.memory_space<vmem>>, %arg7: memref<1x1x256xf32, #tpu.memory_space<vmem>>, %arg8: memref<1x256x128xbf16, #tpu.memory_space<vmem>>, %arg9: memref<1x1x128xf32, #tpu.memory_space<vmem>>, %arg10: memref<1x1x128xf32, #tpu.memory_space<vmem>>, %arg11: memref<1x1x128xf32, #tpu.memory_space<vmem>>, %arg12: memref<1x128x128xbf16, #tpu.memory_space<vmem>>, %arg13: memref<1x1x128xf32, #tpu.memory_space<vmem>>, %arg14: memref<1x128x128xbf16, #tpu.memory_space<vmem>>, %arg15: memref<1x1x128xf32, #tpu.memory_space<vmem>>, %arg16: memref<1x1x128xf32, #tpu.memory_space<vmem>>, %arg17: memref<1x1x128xf32, #tpu.memory_space<vmem>>, %arg18: memref<1x8x128xbf16, #tpu.memory_space<vmem>>, %arg19: memref<8x256xbf16, #tpu.memory_space<vmem>>) attributes {dimension_semantics = [#tpu.dimension_semantics<parallel>, #tpu.dimension_semantics<arbitrary>], iteration_bounds = array<i64: 2, 2>, scalar_prefetch = 0 : i64, scratch_operands = 1 : i64, tpu.core_type = #tpu.core_type<tc>, window_params = [{transform_indices = @transform_0, window_bounds = array<i64: 1, 8, 128>}, {transform_indices = @transform_1, window_bounds = array<i64: 1, 8, 128>}, {transform_indices = @transform_2, window_bounds = array<i64: 1, 128, 256>}, {transform_indices = @transform_3, window_bounds = array<i64: 1, 1, 256>}, {transform_indices = @transform_4, window_bounds = array<i64: 1, 128, 256>}, {transform_indices = @transform_5, window_bounds = array<i64: 1, 1, 256>}, {transform_indices = @transform_6, window_bounds = array<i64: 1, 256, 128>}, {transform_indices = @transform_7, window_bounds = array<i64: 1, 1, 128>}, {transform_indices = @transform_8, window_bounds = array<i64: 1, 1, 128>}, {transform_indices = @transform_9, window_bounds = array<i64: 1, 1, 128>}, {transform_indices = @transform_10, window_bounds = array<i64: 1, 128, 128>}, {transform_indices = @transform_11, window_bounds = array<i64: 1, 1, 128>}, {transform_indices = @transform_12, window_bounds = array<i64: 1, 128, 128>}, {transform_indices = @transform_13, window_bounds = array<i64: 1, 1, 128>}, {transform_indices = @transform_14, window_bounds = array<i64: 1, 1, 128>}, {transform_indices = @transform_15, window_bounds = array<i64: 1, 1, 128>}, {transform_indices = @transform_16, window_bounds = array<i64: 1, 8, 128>}]} {
    %c0_i32 = arith.constant 0 : i32
    %0 = arith.cmpi eq, %arg1, %c0_i32 : i32
    %1 = arith.extui %0 : i1 to i32
    %c0_i32_0 = arith.constant 0 : i32
    %2 = arith.cmpi ne, %1, %c0_i32_0 : i32
    scf.if %2 {
      %c0_87 = arith.constant 0 : index
      %c0_88 = arith.constant 0 : index
      %c0_89 = arith.constant 0 : index
      %171 = vector.load %arg2[%c0_87, %c0_88, %c0_89] : memref<1x8x128xbf16, #tpu.memory_space<vmem>>, vector<1x8x128xbf16>
      %c0_90 = arith.constant 0 : index
      %c0_91 = arith.constant 0 : index
      %c0_92 = arith.constant 0 : index
      %172 = vector.load %arg18[%c0_90, %c0_91, %c0_92] : memref<1x8x128xbf16, #tpu.memory_space<vmem>>, vector<1x8x128xbf16>
      tpu.vector_store %arg18[%c0_90, %c0_91, %c0_92], %171 {strides = array<i32>} : memref<1x8x128xbf16, #tpu.memory_space<vmem>>, vector<1x8x128xbf16>,
    } else {
    }
    %c0 = arith.constant 0 : index
    %c0_1 = arith.constant 0 : index
    %c0_2 = arith.constant 0 : index
    %3 = vector.load %arg18[%c0, %c0_1, %c0_2] : memref<1x8x128xbf16, #tpu.memory_space<vmem>>, vector<1x8x128xbf16>
    %4 = vector.shape_cast %3 : vector<1x8x128xbf16> to vector<8x128xbf16>
    %c0_3 = arith.constant 0 : index
    %c0_4 = arith.constant 0 : index
    %c0_5 = arith.constant 0 : index
    %5 = vector.load %arg3[%c0_3, %c0_4, %c0_5] : memref<1x8x128xbf16, #tpu.memory_space<vmem>>, vector<1x8x128xbf16>
    %6 = vector.shape_cast %5 : vector<1x8x128xbf16> to vector<8x128xbf16>
    %7 = arith.extf %4 : vector<8x128xbf16> to vector<8x128xf32>
    %c0_6 = arith.constant 0 : index
    %c0_7 = arith.constant 0 : index
    %c0_8 = arith.constant 0 : index
    %8 = vector.load %arg4[%c0_6, %c0_7, %c0_8] : memref<1x128x256xbf16, #tpu.memory_space<vmem>>, vector<1x128x256xbf16>
    %9 = vector.shape_cast %8 : vector<1x128x256xbf16> to vector<128x256xbf16>
    %cst = arith.constant dense<0.000000e+00> : vector<8x256xf32>
    %10 = tpu.matmul %4, %9, %cst {dimension_numbers = #tpu.dot_dimension_numbers<[1], [0], [0], [1], [0, 0, 1, 1], [], []>} : vector<8x128xbf16>, vector<128x256xbf16>, vector<8x256xf32> -> vector<8x256xf32>
    %c0_9 = arith.constant 0 : index
    %c0_10 = arith.constant 0 : index
    %c0_11 = arith.constant 0 : index
    %11 = vector.load %arg5[%c0_9, %c0_10, %c0_11] : memref<1x1x256xf32, #tpu.memory_space<vmem>>, vector<1x1x256xf32>
    %12 = vector.shape_cast %11 : vector<1x1x256xf32> to vector<1x256xf32>
    %13 = vector.broadcast %12 : vector<1x256xf32> to vector<8x256xf32>
    %14 = arith.addf %10, %13 : vector<8x256xf32>
    %c0_12 = arith.constant 0 : index
    %c0_13 = arith.constant 0 : index
    %c0_14 = arith.constant 0 : index
    %15 = vector.load %arg6[%c0_12, %c0_13, %c0_14] : memref<1x128x256xbf16, #tpu.memory_space<vmem>>, vector<1x128x256xbf16>
    %16 = vector.shape_cast %15 : vector<1x128x256xbf16> to vector<128x256xbf16>
    %cst_15 = arith.constant dense<0.000000e+00> : vector<8x256xf32>
    %17 = tpu.matmul %6, %16, %cst_15 {dimension_numbers = #tpu.dot_dimension_numbers<[1], [0], [0], [1], [0, 0, 1, 1], [], []>} : vector<8x128xbf16>, vector<128x256xbf16>, vector<8x256xf32> -> vector<8x256xf32>
    %c0_16 = arith.constant 0 : index
    %c0_17 = arith.constant 0 : index
    %c0_18 = arith.constant 0 : index
    %18 = vector.load %arg7[%c0_16, %c0_17, %c0_18] : memref<1x1x256xf32, #tpu.memory_space<vmem>>, vector<1x1x256xf32>
    %19 = vector.shape_cast %18 : vector<1x1x256xf32> to vector<1x256xf32>
    %20 = vector.broadcast %19 : vector<1x256xf32> to vector<8x256xf32>
    %21 = arith.addf %17, %20 : vector<8x256xf32>
    %22 = arith.truncf %14 : vector<8x256xf32> to vector<8x256xbf16>
    %23 = vector.shape_cast %22 : vector<8x256xbf16> to vector<1x8x256xbf16>
    %cst_19 = arith.constant 2.500000e-01 : bf16
    %24 = vector.broadcast %cst_19 : bf16 to vector<1x8x256xbf16>
    %25 = arith.mulf %23, %24 : vector<1x8x256xbf16>
    %26 = arith.truncf %21 : vector<8x256xf32> to vector<8x256xbf16>
    %27 = vector.shape_cast %26 : vector<8x256xbf16> to vector<1x8x256xbf16>
    %28 = tpu.iota {dimensions = array<i32: 0>} : vector<8x8xi32>
    %29 = tpu.iota {dimensions = array<i32: 1>} : vector<8x8xi32>
    %30 = arith.cmpi slt, %29, %28 : vector<8x8xi32>
    %31 = vector.shape_cast %30 : vector<8x8xi1> to vector<1x8x8xi1>
    %c0_i32_20 = arith.constant 0 : i32
    %32 = vector.broadcast %c0_i32_20 : i32 to vector<8x8xi32>
    %33 = arith.cmpi sgt, %28, %32 : vector<8x8xi32>
    %34 = vector.shape_cast %33 : vector<8x8xi1> to vector<1x8x8xi1>
    %35 = vector.extract_strided_slice %25 {offsets = [0, 0, 0], sizes = [1, 8, 128], strides = [1, 1, 1]} : vector<1x8x256xbf16> to vector<1x8x128xbf16>
    %36 = vector.extract_strided_slice %23 {offsets = [0, 0, 0], sizes = [1, 8, 128], strides = [1, 1, 1]} : vector<1x8x256xbf16> to vector<1x8x128xbf16>
    "tpu.trace_start"() <{level = 10 : i32, message = "bqd,bkd->bqk"}> : () -> ()
    %cst_21 = arith.constant dense<0.000000e+00> : vector<1x8x8xf32>
    %37 = tpu.matmul %35, %36, %cst_21 {dimension_numbers = #tpu.dot_dimension_numbers<[2], [2], [1], [1], [0, 0, 0, 1, 1, 1], [0], [0]>} : vector<1x8x128xbf16>, vector<1x8x128xbf16>, vector<1x8x8xf32> -> vector<1x8x8xf32>
    %cst_22 = arith.constant -1.000000e+32 : f32
    "tpu.trace_stop"() : () -> ()
    %38 = vector.broadcast %cst_22 : f32 to vector<1x8x8xf32>
    %39 = arith.select %31, %37, %38 : vector<1x8x8xi1>, vector<1x8x8xf32>
    %cst_23 = arith.constant dense<0xFF800000> : vector<1x8xf32>
    %40 = vector.multi_reduction <maximumf>, %39, %cst_23 [2] : vector<1x8x8xf32> to vector<1x8xf32>
    %41 = vector.shape_cast %40 : vector<1x8xf32> to vector<1x8x1xf32>
    %42 = vector.broadcast %41 : vector<1x8x1xf32> to vector<1x8x8xf32>
    %43 = arith.subf %39, %42 : vector<1x8x8xf32>
    %44 = math.exp %43 : vector<1x8x8xf32>
    %cst_24 = arith.constant dense<0.000000e+00> : vector<1x8xf32>
    %45 = vector.multi_reduction <add>, %44, %cst_24 [2] : vector<1x8x8xf32> to vector<1x8xf32>
    %46 = vector.shape_cast %45 : vector<1x8xf32> to vector<1x8x1xf32>
    %47 = tpu.reciprocal %46 {approx = true} : vector<1x8x1xf32> -> vector<1x8x1xf32>
    %48 = vector.broadcast %47 : vector<1x8x1xf32> to vector<1x8x8xf32>
    %49 = arith.mulf %44, %48 : vector<1x8x8xf32>
    %cst_25 = arith.constant 0.000000e+00 : f32
    %50 = vector.broadcast %cst_25 : f32 to vector<1x8x8xf32>
    %51 = arith.select %34, %49, %50 : vector<1x8x8xi1>, vector<1x8x8xf32>
    %52 = arith.truncf %51 : vector<1x8x8xf32> to vector<1x8x8xbf16>
    %53 = vector.extract_strided_slice %27 {offsets = [0, 0, 0], sizes = [1, 8, 128], strides = [1, 1, 1]} : vector<1x8x256xbf16> to vector<1x8x128xbf16>
    "tpu.trace_start"() <{level = 10 : i32, message = "bqk,bkd->bqd"}> : () -> ()
    %cst_26 = arith.constant dense<0.000000e+00> : vector<1x8x128xf32>
    %54 = tpu.matmul %52, %53, %cst_26 {dimension_numbers = #tpu.dot_dimension_numbers<[2], [1], [1], [2], [0, 0, 0, 1, 1, 2], [0], [0]>} : vector<1x8x8xbf16>, vector<1x8x128xbf16>, vector<1x8x128xf32> -> vector<1x8x128xf32>
    "tpu.trace_stop"() : () -> ()
    %55 = vector.shape_cast %54 : vector<1x8x128xf32> to vector<8x128xf32>
    %56 = arith.truncf %55 : vector<8x128xf32> to vector<8x128xbf16>
    %c0_27 = arith.constant 0 : index
    %c0_28 = arith.constant 0 : index
    %57 = vector.load %arg19[%c0_27, %c0_28] : memref<8x256xbf16, #tpu.memory_space<vmem>>, vector<8x128xbf16>
    tpu.vector_store %arg19[%c0_27, %c0_28], %56 {strides = array<i32>} : memref<8x256xbf16, #tpu.memory_space<vmem>>, vector<8x128xbf16>,
    %58 = vector.extract_strided_slice %25 {offsets = [0, 0, 128], sizes = [1, 8, 128], strides = [1, 1, 1]} : vector<1x8x256xbf16> to vector<1x8x128xbf16>
    %59 = vector.extract_strided_slice %23 {offsets = [0, 0, 128], sizes = [1, 8, 128], strides = [1, 1, 1]} : vector<1x8x256xbf16> to vector<1x8x128xbf16>
    "tpu.trace_start"() <{level = 10 : i32, message = "bqd,bkd->bqk"}> : () -> ()
    %cst_29 = arith.constant dense<0.000000e+00> : vector<1x8x8xf32>
    %60 = tpu.matmul %58, %59, %cst_29 {dimension_numbers = #tpu.dot_dimension_numbers<[2], [2], [1], [1], [0, 0, 0, 1, 1, 1], [0], [0]>} : vector<1x8x128xbf16>, vector<1x8x128xbf16>, vector<1x8x8xf32> -> vector<1x8x8xf32>
    %cst_30 = arith.constant -1.000000e+32 : f32
    "tpu.trace_stop"() : () -> ()
    %61 = vector.broadcast %cst_30 : f32 to vector<1x8x8xf32>
    %62 = arith.select %31, %60, %61 : vector<1x8x8xi1>, vector<1x8x8xf32>
    %cst_31 = arith.constant dense<0xFF800000> : vector<1x8xf32>
    %63 = vector.multi_reduction <maximumf>, %62, %cst_31 [2] : vector<1x8x8xf32> to vector<1x8xf32>
    %64 = vector.shape_cast %63 : vector<1x8xf32> to vector<1x8x1xf32>
    %65 = vector.broadcast %64 : vector<1x8x1xf32> to vector<1x8x8xf32>
    %66 = arith.subf %62, %65 : vector<1x8x8xf32>
    %67 = math.exp %66 : vector<1x8x8xf32>
    %cst_32 = arith.constant dense<0.000000e+00> : vector<1x8xf32>
    %68 = vector.multi_reduction <add>, %67, %cst_32 [2] : vector<1x8x8xf32> to vector<1x8xf32>
    %69 = vector.shape_cast %68 : vector<1x8xf32> to vector<1x8x1xf32>
    %70 = tpu.reciprocal %69 {approx = true} : vector<1x8x1xf32> -> vector<1x8x1xf32>
    %71 = vector.broadcast %70 : vector<1x8x1xf32> to vector<1x8x8xf32>
    %72 = arith.mulf %67, %71 : vector<1x8x8xf32>
    %cst_33 = arith.constant 0.000000e+00 : f32
    %73 = vector.broadcast %cst_33 : f32 to vector<1x8x8xf32>
    %74 = arith.select %34, %72, %73 : vector<1x8x8xi1>, vector<1x8x8xf32>
    %75 = arith.truncf %74 : vector<1x8x8xf32> to vector<1x8x8xbf16>
    %76 = vector.extract_strided_slice %27 {offsets = [0, 0, 128], sizes = [1, 8, 128], strides = [1, 1, 1]} : vector<1x8x256xbf16> to vector<1x8x128xbf16>
    "tpu.trace_start"() <{level = 10 : i32, message = "bqk,bkd->bqd"}> : () -> ()
    %cst_34 = arith.constant dense<0.000000e+00> : vector<1x8x128xf32>
    %77 = tpu.matmul %75, %76, %cst_34 {dimension_numbers = #tpu.dot_dimension_numbers<[2], [1], [1], [2], [0, 0, 0, 1, 1, 2], [0], [0]>} : vector<1x8x8xbf16>, vector<1x8x128xbf16>, vector<1x8x128xf32> -> vector<1x8x128xf32>
    "tpu.trace_stop"() : () -> ()
    %78 = vector.shape_cast %77 : vector<1x8x128xf32> to vector<8x128xf32>
    %79 = arith.truncf %78 : vector<8x128xf32> to vector<8x128xbf16>
    %c0_35 = arith.constant 0 : index
    %c128 = arith.constant 128 : index
    %80 = vector.load %arg19[%c0_35, %c128] : memref<8x256xbf16, #tpu.memory_space<vmem>>, vector<8x128xbf16>
    tpu.vector_store %arg19[%c0_35, %c128], %79 {strides = array<i32>} : memref<8x256xbf16, #tpu.memory_space<vmem>>, vector<8x128xbf16>,
    %c0_36 = arith.constant 0 : index
    %c0_37 = arith.constant 0 : index
    %81 = vector.load %arg19[%c0_36, %c0_37] : memref<8x256xbf16, #tpu.memory_space<vmem>>, vector<8x256xbf16>
    %c0_38 = arith.constant 0 : index
    %c0_39 = arith.constant 0 : index
    %c0_40 = arith.constant 0 : index
    %82 = vector.load %arg8[%c0_38, %c0_39, %c0_40] : memref<1x256x128xbf16, #tpu.memory_space<vmem>>, vector<1x256x128xbf16>
    %83 = vector.shape_cast %82 : vector<1x256x128xbf16> to vector<256x128xbf16>
    %cst_41 = arith.constant dense<0.000000e+00> : vector<8x128xf32>
    %84 = tpu.matmul %81, %83, %cst_41 {dimension_numbers = #tpu.dot_dimension_numbers<[1], [0], [0], [1], [0, 0, 1, 1], [], []>} : vector<8x256xbf16>, vector<256x128xbf16>, vector<8x128xf32> -> vector<8x128xf32>
    %c0_42 = arith.constant 0 : index
    %c0_43 = arith.constant 0 : index
    %c0_44 = arith.constant 0 : index
    %85 = vector.load %arg9[%c0_42, %c0_43, %c0_44] : memref<1x1x128xf32, #tpu.memory_space<vmem>>, vector<1x1x128xf32>
    %86 = vector.shape_cast %85 : vector<1x1x128xf32> to vector<1x128xf32>
    %87 = vector.broadcast %86 : vector<1x128xf32> to vector<8x128xf32>
    %88 = arith.addf %84, %87 : vector<8x128xf32>
    %89 = tpu.iota {dimensions = array<i32: 1>} : vector<1x128xi32>
    %c32_i32 = arith.constant 32 : i32
    %90 = vector.broadcast %c32_i32 : i32 to vector<1x128xi32>
    %91 = arith.cmpi slt, %89, %90 : vector<1x128xi32>
    %92 = arith.addf %7, %88 : vector<8x128xf32>
    %c0_45 = arith.constant 0 : index
    %c0_46 = arith.constant 0 : index
    %c0_47 = arith.constant 0 : index
    %93 = vector.load %arg10[%c0_45, %c0_46, %c0_47] : memref<1x1x128xf32, #tpu.memory_space<vmem>>, vector<1x1x128xf32>
    %94 = vector.shape_cast %93 : vector<1x1x128xf32> to vector<1x128xf32>
    %c0_48 = arith.constant 0 : index
    %c0_49 = arith.constant 0 : index
    %c0_50 = arith.constant 0 : index
    %95 = vector.load %arg11[%c0_48, %c0_49, %c0_50] : memref<1x1x128xf32, #tpu.memory_space<vmem>>, vector<1x1x128xf32>
    %96 = vector.shape_cast %95 : vector<1x1x128xf32> to vector<1x128xf32>
    %cst_51 = arith.constant dense<0.000000e+00> : vector<8xf32>
    %97 = vector.multi_reduction <add>, %92, %cst_51 [1] : vector<8x128xf32> to vector<8xf32>
    %98 = vector.shape_cast %97 : vector<8xf32> to vector<8x1xf32>
    %cst_52 = arith.constant 3.125000e-02 : f32
    %99 = vector.broadcast %cst_52 : f32 to vector<8x1xf32>
    %100 = arith.mulf %98, %99 : vector<8x1xf32>
    %101 = vector.broadcast %100 : vector<8x1xf32> to vector<8x128xf32>
    %102 = arith.subf %92, %101 : vector<8x128xf32>
    %cst_53 = arith.constant 0.000000e+00 : f32
    %103 = vector.shape_cast %91 : vector<1x128xi1> to vector<1x128xi1>
    %104 = vector.broadcast %103 : vector<1x128xi1> to vector<8x128xi1>
    %105 = vector.broadcast %cst_53 : f32 to vector<8x128xf32>
    %106 = arith.select %104, %102, %105 : vector<8x128xi1>, vector<8x128xf32>
    %107 = arith.mulf %106, %106 : vector<8x128xf32>
    %cst_54 = arith.constant dense<0.000000e+00> : vector<8xf32>
    %108 = vector.multi_reduction <add>, %107, %cst_54 [1] : vector<8x128xf32> to vector<8xf32>
    %109 = vector.shape_cast %108 : vector<8xf32> to vector<8x1xf32>
    %cst_55 = arith.constant 3.125000e-02 : f32
    %110 = vector.broadcast %cst_55 : f32 to vector<8x1xf32>
    %111 = arith.mulf %109, %110 : vector<8x1xf32>
    %cst_56 = arith.constant 9.99999974E-6 : f32
    %112 = vector.broadcast %cst_56 : f32 to vector<8x1xf32>
    %113 = arith.addf %111, %112 : vector<8x1xf32>
    %114 = math.rsqrt %113 : vector<8x1xf32>
    %115 = vector.broadcast %114 : vector<8x1xf32> to vector<8x128xf32>
    %116 = arith.mulf %106, %115 : vector<8x128xf32>
    %117 = vector.broadcast %94 : vector<1x128xf32> to vector<8x128xf32>
    %118 = arith.mulf %116, %117 : vector<8x128xf32>
    %119 = vector.broadcast %96 : vector<1x128xf32> to vector<8x128xf32>
    %120 = arith.addf %118, %119 : vector<8x128xf32>
    %121 = arith.truncf %120 : vector<8x128xf32> to vector<8x128xbf16>
    %c0_57 = arith.constant 0 : index
    %c0_58 = arith.constant 0 : index
    %c0_59 = arith.constant 0 : index
    %122 = vector.load %arg12[%c0_57, %c0_58, %c0_59] : memref<1x128x128xbf16, #tpu.memory_space<vmem>>, vector<1x128x128xbf16>
    %123 = vector.shape_cast %122 : vector<1x128x128xbf16> to vector<128x128xbf16>
    %cst_60 = arith.constant dense<0.000000e+00> : vector<8x128xf32>
    %124 = tpu.matmul %121, %123, %cst_60 {dimension_numbers = #tpu.dot_dimension_numbers<[1], [0], [0], [1], [0, 0, 1, 1], [], []>} : vector<8x128xbf16>, vector<128x128xbf16>, vector<8x128xf32> -> vector<8x128xf32>
    %c0_61 = arith.constant 0 : index
    %c0_62 = arith.constant 0 : index
    %c0_63 = arith.constant 0 : index
    %125 = vector.load %arg13[%c0_61, %c0_62, %c0_63] : memref<1x1x128xf32, #tpu.memory_space<vmem>>, vector<1x1x128xf32>
    %126 = vector.shape_cast %125 : vector<1x1x128xf32> to vector<1x128xf32>
    %127 = vector.broadcast %126 : vector<1x128xf32> to vector<8x128xf32>
    %128 = arith.addf %124, %127 : vector<8x128xf32>
    %cst_64 = arith.constant 0.000000e+00 : f32
    %129 = vector.broadcast %cst_64 : f32 to vector<8x128xf32>
    %130 = arith.maximumf %128, %129 : vector<8x128xf32>
    %131 = arith.truncf %130 : vector<8x128xf32> to vector<8x128xbf16>
    %c0_65 = arith.constant 0 : index
    %c0_66 = arith.constant 0 : index
    %c0_67 = arith.constant 0 : index
    %132 = vector.load %arg14[%c0_65, %c0_66, %c0_67] : memref<1x128x128xbf16, #tpu.memory_space<vmem>>, vector<1x128x128xbf16>
    %133 = vector.shape_cast %132 : vector<1x128x128xbf16> to vector<128x128xbf16>
    %cst_68 = arith.constant dense<0.000000e+00> : vector<8x128xf32>
    %134 = tpu.matmul %131, %133, %cst_68 {dimension_numbers = #tpu.dot_dimension_numbers<[1], [0], [0], [1], [0, 0, 1, 1], [], []>} : vector<8x128xbf16>, vector<128x128xbf16>, vector<8x128xf32> -> vector<8x128xf32>
    %c0_69 = arith.constant 0 : index
    %c0_70 = arith.constant 0 : index
    %c0_71 = arith.constant 0 : index
    %135 = vector.load %arg15[%c0_69, %c0_70, %c0_71] : memref<1x1x128xf32, #tpu.memory_space<vmem>>, vector<1x1x128xf32>
    %136 = vector.shape_cast %135 : vector<1x1x128xf32> to vector<1x128xf32>
    %137 = vector.broadcast %136 : vector<1x128xf32> to vector<8x128xf32>
    %138 = arith.addf %134, %137 : vector<8x128xf32>
    %139 = arith.addf %120, %138 : vector<8x128xf32>
    %c0_72 = arith.constant 0 : index
    %c0_73 = arith.constant 0 : index
    %c0_74 = arith.constant 0 : index
    %140 = vector.load %arg16[%c0_72, %c0_73, %c0_74] : memref<1x1x128xf32, #tpu.memory_space<vmem>>, vector<1x1x128xf32>
    %141 = vector.shape_cast %140 : vector<1x1x128xf32> to vector<1x128xf32>
    %c0_75 = arith.constant 0 : index
    %c0_76 = arith.constant 0 : index
    %c0_77 = arith.constant 0 : index
    %142 = vector.load %arg17[%c0_75, %c0_76, %c0_77] : memref<1x1x128xf32, #tpu.memory_space<vmem>>, vector<1x1x128xf32>
    %143 = vector.shape_cast %142 : vector<1x1x128xf32> to vector<1x128xf32>
    %cst_78 = arith.constant dense<0.000000e+00> : vector<8xf32>
    %144 = vector.multi_reduction <add>, %139, %cst_78 [1] : vector<8x128xf32> to vector<8xf32>
    %145 = vector.shape_cast %144 : vector<8xf32> to vector<8x1xf32>
    %cst_79 = arith.constant 3.125000e-02 : f32
    %146 = vector.broadcast %cst_79 : f32 to vector<8x1xf32>
    %147 = arith.mulf %145, %146 : vector<8x1xf32>
    %148 = vector.broadcast %147 : vector<8x1xf32> to vector<8x128xf32>
    %149 = arith.subf %139, %148 : vector<8x128xf32>
    %cst_80 = arith.constant 0.000000e+00 : f32
    %150 = vector.shape_cast %91 : vector<1x128xi1> to vector<1x128xi1>
    %151 = vector.broadcast %150 : vector<1x128xi1> to vector<8x128xi1>
    %152 = vector.broadcast %cst_80 : f32 to vector<8x128xf32>
    %153 = arith.select %151, %149, %152 : vector<8x128xi1>, vector<8x128xf32>
    %154 = arith.mulf %153, %153 : vector<8x128xf32>
    %cst_81 = arith.constant dense<0.000000e+00> : vector<8xf32>
    %155 = vector.multi_reduction <add>, %154, %cst_81 [1] : vector<8x128xf32> to vector<8xf32>
    %156 = vector.shape_cast %155 : vector<8xf32> to vector<8x1xf32>
    %cst_82 = arith.constant 3.125000e-02 : f32
    %157 = vector.broadcast %cst_82 : f32 to vector<8x1xf32>
    %158 = arith.mulf %156, %157 : vector<8x1xf32>
    %cst_83 = arith.constant 9.99999974E-6 : f32
    %159 = vector.broadcast %cst_83 : f32 to vector<8x1xf32>
    %160 = arith.addf %158, %159 : vector<8x1xf32>
    %161 = math.rsqrt %160 : vector<8x1xf32>
    %162 = vector.broadcast %161 : vector<8x1xf32> to vector<8x128xf32>
    %163 = arith.mulf %153, %162 : vector<8x128xf32>
    %164 = vector.broadcast %141 : vector<1x128xf32> to vector<8x128xf32>
    %165 = arith.mulf %163, %164 : vector<8x128xf32>
    %166 = vector.broadcast %143 : vector<1x128xf32> to vector<8x128xf32>
    %167 = arith.addf %165, %166 : vector<8x128xf32>
    %168 = vector.shape_cast %167 : vector<8x128xf32> to vector<1x8x128xf32>
    %169 = arith.truncf %168 : vector<1x8x128xf32> to vector<1x8x128xbf16>
    %c0_84 = arith.constant 0 : index
    %c0_85 = arith.constant 0 : index
    %c0_86 = arith.constant 0 : index
    %170 = vector.load %arg18[%c0_84, %c0_85, %c0_86] : memref<1x8x128xbf16, #tpu.memory_space<vmem>>, vector<1x8x128xbf16>
    tpu.vector_store %arg18[%c0_84, %c0_85, %c0_86], %169 {strides = array<i32>} : memref<1x8x128xbf16, #tpu.memory_space<vmem>>, vector<1x8x128xbf16>,
    return
  }
  func.func @transform_0(%arg0: i32, %arg1: i32) -> (i32, i32, i32) {
    %c0_i32 = arith.constant 0 : i32
    %c0_i32_0 = arith.constant 0 : i32
    %c0_i32_1 = arith.constant 0 : i32
    return %arg0, %c0_i32, %c0_i32_0 : i32, i32, i32
  }
  func.func @transform_1(%arg0: i32, %arg1: i32) -> (i32, i32, i32) {
    %c0_i32 = arith.constant 0 : i32
    %c0_i32_0 = arith.constant 0 : i32
    %c0_i32_1 = arith.constant 0 : i32
    return %arg0, %c0_i32, %c0_i32_0 : i32, i32, i32
  }
  func.func @transform_2(%arg0: i32, %arg1: i32) -> (i32, i32, i32) {
    %c0_i32 = arith.constant 0 : i32
    %c0_i32_0 = arith.constant 0 : i32
    %c0_i32_1 = arith.constant 0 : i32
    return %arg1, %c0_i32, %c0_i32_0 : i32, i32, i32
  }
  func.func @transform_3(%arg0: i32, %arg1: i32) -> (i32, i32, i32) {
    %c0_i32 = arith.constant 0 : i32
    %c0_i32_0 = arith.constant 0 : i32
    %c0_i32_1 = arith.constant 0 : i32
    return %arg1, %c0_i32, %c0_i32_0 : i32, i32, i32
  }
  func.func @transform_4(%arg0: i32, %arg1: i32) -> (i32, i32, i32) {
    %c0_i32 = arith.constant 0 : i32
    %c0_i32_0 = arith.constant 0 : i32
    %c0_i32_1 = arith.constant 0 : i32
    return %arg1, %c0_i32, %c0_i32_0 : i32, i32, i32
  }
  func.func @transform_5(%arg0: i32, %arg1: i32) -> (i32, i32, i32) {
    %c0_i32 = arith.constant 0 : i32
    %c0_i32_0 = arith.constant 0 : i32
    %c0_i32_1 = arith.constant 0 : i32
    return %arg1, %c0_i32, %c0_i32_0 : i32, i32, i32
  }
  func.func @transform_6(%arg0: i32, %arg1: i32) -> (i32, i32, i32) {
    %c0_i32 = arith.constant 0 : i32
    %c0_i32_0 = arith.constant 0 : i32
    %c0_i32_1 = arith.constant 0 : i32
    return %arg1, %c0_i32, %c0_i32_0 : i32, i32, i32
  }
  func.func @transform_7(%arg0: i32, %arg1: i32) -> (i32, i32, i32) {
    %c0_i32 = arith.constant 0 : i32
    %c0_i32_0 = arith.constant 0 : i32
    %c0_i32_1 = arith.constant 0 : i32
    return %arg1, %c0_i32, %c0_i32_0 : i32, i32, i32
  }
  func.func @transform_8(%arg0: i32, %arg1: i32) -> (i32, i32, i32) {
    %c0_i32 = arith.constant 0 : i32
    %c0_i32_0 = arith.constant 0 : i32
    %c0_i32_1 = arith.constant 0 : i32
    return %arg1, %c0_i32, %c0_i32_0 : i32, i32, i32
  }
  func.func @transform_9(%arg0: i32, %arg1: i32) -> (i32, i32, i32) {
    %c0_i32 = arith.constant 0 : i32
    %c0_i32_0 = arith.constant 0 : i32
    %c0_i32_1 = arith.constant 0 : i32
    return %arg1, %c0_i32, %c0_i32_0 : i32, i32, i32
  }
  func.func @transform_10(%arg0: i32, %arg1: i32) -> (i32, i32, i32) {
    %c0_i32 = arith.constant 0 : i32
    %c0_i32_0 = arith.constant 0 : i32
    %c0_i32_1 = arith.constant 0 : i32
    return %arg1, %c0_i32, %c0_i32_0 : i32, i32, i32
  }
  func.func @transform_11(%arg0: i32, %arg1: i32) -> (i32, i32, i32) {
    %c0_i32 = arith.constant 0 : i32
    %c0_i32_0 = arith.constant 0 : i32
    %c0_i32_1 = arith.constant 0 : i32
    return %arg1, %c0_i32, %c0_i32_0 : i32, i32, i32
  }
  func.func @transform_12(%arg0: i32, %arg1: i32) -> (i32, i32, i32) {
    %c0_i32 = arith.constant 0 : i32
    %c0_i32_0 = arith.constant 0 : i32
    %c0_i32_1 = arith.constant 0 : i32
    return %arg1, %c0_i32, %c0_i32_0 : i32, i32, i32
  }
  func.func @transform_13(%arg0: i32, %arg1: i32) -> (i32, i32, i32) {
    %c0_i32 = arith.constant 0 : i32
    %c0_i32_0 = arith.constant 0 : i32
    %c0_i32_1 = arith.constant 0 : i32
    return %arg1, %c0_i32, %c0_i32_0 : i32, i32, i32
  }
  func.func @transform_14(%arg0: i32, %arg1: i32) -> (i32, i32, i32) {
    %c0_i32 = arith.constant 0 : i32
    %c0_i32_0 = arith.constant 0 : i32
    %c0_i32_1 = arith.constant 0 : i32
    return %arg1, %c0_i32, %c0_i32_0 : i32, i32, i32
  }
  func.func @transform_15(%arg0: i32, %arg1: i32) -> (i32, i32, i32) {
    %c0_i32 = arith.constant 0 : i32
    %c0_i32_0 = arith.constant 0 : i32
    %c0_i32_1 = arith.constant 0 : i32
    return %arg1, %c0_i32, %c0_i32_0 : i32, i32, i32
  }
  func.func @transform_16(%arg0: i32, %arg1: i32) -> (i32, i32, i32) {
    %c0_i32 = arith.constant 0 : i32
    %c0_i32_0 = arith.constant 0 : i32
    %c0_i32_1 = arith.constant 0 : i32
    return %arg0, %c0_i32, %c0_i32_0 : i32, i32, i32
  }
}

</mosaic_0001>

<llo_original>
// kernel: tpu_custom_call.1
$region0: #{tpu_custom_call.1}
  #allocation0 [shape = 'u32[]', space=smem, size = 0x4, offset = 0x4, fixed_abs, tag = 'smem constant byte address 0x4 - core index']
  #allocation1 [shape = 'u32[72,128]{1,0:T(1,128)}', space=vmem, size = 0x9000, scoped, tag = 'internal scratch']
  #allocation2 [shape = 'bf16[8,256]{1,0:T(8,128)(2,1)}', space=vmem, size = 0x1000, scoped, tag = 'scratch operand']
  %s0 = inlined_call_operand.hbm [shape: bf16[2,8,128], index: 0, kind: input, shape index: {}]
  %s1 = inlined_call_operand.hbm [shape: bf16[2,8,128], index: 1, kind: input, shape index: {}]
  %s2 = inlined_call_operand.hbm [shape: bf16[2,128,256], index: 2, kind: input, shape index: {}]
  %s3 = inlined_call_operand.hbm [shape: f32[2,1,256], index: 3, kind: input, shape index: {}]
  %s4 = inlined_call_operand.hbm [shape: bf16[2,128,256], index: 4, kind: input, shape index: {}]
  %s5 = inlined_call_operand.vmem [shape: f32[2,1,256], index: 5, kind: input, shape index: {}]
  %s6 = inlined_call_operand.hbm [shape: bf16[2,256,128], index: 6, kind: input, shape index: {}]
  %s7 = inlined_call_operand.vmem [shape: f32[2,1,128], index: 7, kind: input, shape index: {}]
  %s8 = inlined_call_operand.hbm [shape: f32[2,1,128], index: 8, kind: input, shape index: {}]
  %s9 = inlined_call_operand.vmem [shape: f32[2,1,128], index: 9, kind: input, shape index: {}]
  %s10 = inlined_call_operand.hbm [shape: bf16[2,128,128], index: 10, kind: input, shape index: {}]
  %s11 = inlined_call_operand.vmem [shape: f32[2,1,128], index: 11, kind: input, shape index: {}]
  %s12 = inlined_call_operand.hbm [shape: bf16[2,128,128], index: 12, kind: input, shape index: {}]
  %s13 = inlined_call_operand.vmem [shape: f32[2,1,128], index: 13, kind: input, shape index: {}]
  %s14 = inlined_call_operand.hbm [shape: f32[2,1,128], index: 14, kind: input, shape index: {}]
  %s15 = inlined_call_operand.vmem [shape: f32[2,1,128], index: 15, kind: input, shape index: {}]
  %s16 = inlined_call_operand.hbm [shape: bf16[2,8,128], index: 16, kind: output, shape index: {}]
  %s17 = sld [smem:[#allocation0]]
  $region141: #{tpu_custom_call.1} parent=0
    _
  %s19 = ssub.s32 1, %s17
  %s20 = scalar_select 0, %s19, %s17
  $region1: #{tpu_custom_call.1} parent=0
    #allocation3 [shape = 'u8[4096]{0}', space=vmem, size = 0x1000, scoped, tag = 'input window, operand 0']
    #allocation4 [shape = 's32[2]{0}', space=sflag, size = 0x8, scoped, tag = 'scoped memory for tpu_custom_call.1']
    #allocation5 [shape = 's32[2]{0}', space=sflag, size = 0x8, scoped, tag = 'scoped memory for tpu_custom_call.1']
    #allocation6 [shape = 'u8[4096]{0}', space=vmem, size = 0x1000, scoped, tag = 'input window, operand 1']
    #allocation7 [shape = 's32[2]{0}', space=sflag, size = 0x8, scoped, tag = 'scoped memory for tpu_custom_call.1']
    #allocation8 [shape = 'u8[131072]{0}', space=vmem, size = 0x20000, scoped, tag = 'input window, operand 2']
    #allocation9 [shape = 'u8[2048]{0}', space=vmem, size = 0x800, scoped, tag = 'input window, operand 3']
    #allocation10 [shape = 's32[2]{0}', space=sflag, size = 0x8, scoped, tag = 'scoped memory for tpu_custom_call.1']
    #allocation11 [shape = 'u8[131072]{0}', space=vmem, size = 0x20000, scoped, tag = 'input window, operand 4']
    #allocation12 [shape = 'u8[131072]{0}', space=vmem, size = 0x20000, scoped, tag = 'input window, operand 6']
    #allocation13 [shape = 's32[2]{0}', space=sflag, size = 0x8, scoped, tag = 'scoped memory for tpu_custom_call.1']
    #allocation14 [shape = 'u8[1024]{0}', space=vmem, size = 0x400, scoped, tag = 'input window, operand 8']
    #allocation15 [shape = 'u8[65536]{0}', space=vmem, size = 0x10000, scoped, tag = 'input window, operand 10']
    #allocation16 [shape = 's32[2]{0}', space=sflag, size = 0x8, scoped, tag = 'scoped memory for tpu_custom_call.1']
    #allocation17 [shape = 'u8[65536]{0}', space=vmem, size = 0x10000, scoped, tag = 'input window, operand 12']
    #allocation18 [shape = 'u8[1024]{0}', space=vmem, size = 0x400, scoped, tag = 'input window, operand 14']
    #allocation19 [shape = 's32[2]{0}', space=sflag, size = 0x8, scoped, tag = 'scoped memory for tpu_custom_call.1']
    #allocation20 [shape = 'u8[4096]{0}', space=vmem, size = 0x1000, scoped, tag = 'output window, operand 0']
    %21 = vsyncpa [#allocation4], 0
    %s22 = scalar_lea.sflag [#allocation4], 1
    %23 = vsyncpa %s22, 0
    %24 = vsyncpa [#allocation7], 0
    %s25 = scalar_lea.sflag [#allocation7], 1
    %26 = vsyncpa %s25, 0
    %27 = vsyncpa [#allocation10], 0
    %s28 = scalar_lea.sflag [#allocation10], 1
    %29 = vsyncpa %s28, 0
    %30 = vsyncpa [#allocation13], 0
    %s31 = scalar_lea.sflag [#allocation13], 1
    %32 = vsyncpa %s31, 0
    %33 = vsyncpa [#allocation16], 0
    %s34 = scalar_lea.sflag [#allocation16], 1
    %35 = vsyncpa %s34, 0
    %36 = vsyncpa [#allocation19], 0
    %s37 = scalar_lea.sflag [#allocation19], 1
    %38 = vsyncpa %s37, 0
    %39 = vsyncpa [#allocation5], 0
    %s40 = scalar_lea.sflag [#allocation5], 1
    %41 = vsyncpa %s40, 0
    loop: start=0, step=1, limit=6
    $region2: #{tpu_custom_call.1} parent=1 // loop_pre_header
      _
    $region3: #{tpu_custom_call.1} parent=1 // loop_header
      %s43 = sphi 0, %s47
      %p44 = scmp.ge.s32.totalorder %s43, 6
      %s50 = sphi 0, %s62
      %s51 = sphi 0, %s58
      %s52 = sphi 0, %s50
      %s53 = sphi 0, %s51
      %s54 = sphi 0, %s52
      %s55 = sphi 0, %s53
      %s65 = sphi 0, %s67
      %s68 = sphi 0, %s65
      %s69 = sphi 0, %s68
      %s85 = sphi 0, %s69
      %s91 = sphi 0, %s93
      %s94 = sphi 0, %s91
      %s95 = sphi 0, %s94
      %s111 = sphi 0, %s95
      %s117 = sphi 0, %s119
      %s120 = sphi 0, %s117
      %s121 = sphi 0, %s120
      %s137 = sphi 0, %s121
      %s143 = sphi 0, %s145
      %s146 = sphi 0, %s143
      %s147 = sphi 0, %s146
      %s163 = sphi 0, %s147
      %s169 = sphi 0, %s171
      %s172 = sphi 0, %s169
      %s173 = sphi 0, %s172
      %s189 = sphi 0, %s173
      %s195 = sphi 0, %s197
      %s198 = sphi 0, %s195
      %s199 = sphi 0, %s198
      %s215 = sphi 0, %s199
      %s221 = sphi 0, %s223
      %s224 = sphi 0, %s221
      %s225 = sphi 0, %s224
      %s241 = sphi 0, %s225
      %s247 = sphi 0, %s249
      %s250 = sphi 0, %s247
      %s251 = sphi 0, %s250
      %s267 = sphi 0, %s251
      %s273 = sphi 0, %s275
      %s276 = sphi 0, %s273
      %s277 = sphi 0, %s276
      %s293 = sphi 0, %s277
      %s299 = sphi 0, %s301
      %s302 = sphi 0, %s299
      %s303 = sphi 0, %s302
      %s319 = sphi 0, %s303
      %s325 = sphi 0, %s327
      %s328 = sphi 0, %s325
      %s329 = sphi 0, %s328
      %s345 = sphi 0, %s329
      %s351 = sphi 0, %s353
      %s354 = sphi 0, %s351
      %s355 = sphi 0, %s354
      %s371 = sphi 0, %s355
      %s377 = sphi 0, %s379
      %s380 = sphi 0, %s377
      %s381 = sphi 0, %s380
      %s397 = sphi 0, %s381
      %s403 = sphi 0, %s405
      %s406 = sphi 0, %s403
      %s407 = sphi 0, %s406
      %s423 = sphi 0, %s407
      %s429 = sphi 0, %s431
      %s432 = sphi 0, %s429
      %s433 = sphi 0, %s432
      %s449 = sphi 0, %s433
      %s455 = sphi 0, %s457
      %s458 = sphi 0, %s455
      %s459 = sphi 0, %s458
      %s475 = sphi 0, %s459
      %s481 = sphi 0, %s483
      %s484 = sphi 0, %s481
      %s485 = sphi 0, %s484
      %s501 = sphi 0, %s485
    $region4: #{tpu_custom_call.1} parent=1 // loop_header_branch
      %46 = sbr.rel (%p44) target = $region8
    $region5: #{tpu_custom_call.1} parent=1 // loop_body
      %s48 = ssub.s32 %s43, 1
      %s49 = ssub.s32 %s43, 2
      %s56 = sadd.s32 1, %s51
      %p57 = scmp.ge.s32.totalorder %s56, 2
      %s58 = scalar_select %p57, 0, %s56
      %s59 = sadd.s32 1, %s50
      %s60 = scalar_select %p57, %s59, %s50
      %p61 = scmp.ge.s32.totalorder %s60, 2
      %s62 = scalar_select %p61, 0, %s60
      %s63 = ssub.s32 %s50, %s62
      %p64 = scmp.eq.s32.totalorder %s63, 0
      %s66 = sadd.s32 %s65, 1
      %s67 = scalar_select %p64, %s65, %s66
      %p70 = pneg %p64
      %p71 = scmp.eq.s32.totalorder %s43, 3
      %p72 = por %p70, %p71
      %p73 = scmp.ne.s32.totalorder %s65, %s68
      %p74 = scmp.eq.s32.totalorder %s43, 0
      %p75 = por %p73, %p74
      %p76 = scmp.ne.s32.totalorder %s65, %s68
      %p77 = scmp.eq.s32.totalorder %s48, 3
      %p78 = por %p76, %p77
      %p79 = scmp.ne.s32.totalorder %s68, %s69
      %p80 = scmp.eq.s32.totalorder %s48, 0
      %p81 = por %p79, %p80
      %p82 = scmp.ne.s32.totalorder %s68, %s69
      %p83 = scmp.eq.s32.totalorder %s49, 3
      %p84 = por %p82, %p83
      %p86 = scmp.ne.s32.totalorder %s69, %s85
      %p87 = scmp.eq.s32.totalorder %s49, 0
      %p88 = por %p86, %p87
      %s89 = ssub.s32 %s50, %s62
      %p90 = scmp.eq.s32.totalorder %s89, 0
      %s92 = sadd.s32 %s91, 1
      %s93 = scalar_select %p90, %s91, %s92
      %p96 = pneg %p90
      %p97 = scmp.eq.s32.totalorder %s43, 3
      %p98 = por %p96, %p97
      %p99 = scmp.ne.s32.totalorder %s91, %s94
      %p100 = scmp.eq.s32.totalorder %s43, 0
      %p101 = por %p99, %p100
      %p102 = scmp.ne.s32.totalorder %s91, %s94
      %p103 = scmp.eq.s32.totalorder %s48, 3
      %p104 = por %p102, %p103
      %p105 = scmp.ne.s32.totalorder %s94, %s95
      %p106 = scmp.eq.s32.totalorder %s48, 0
      %p107 = por %p105, %p106
      %p108 = scmp.ne.s32.totalorder %s94, %s95
      %p109 = scmp.eq.s32.totalorder %s49, 3
      %p110 = por %p108, %p109
      %p112 = scmp.ne.s32.totalorder %s95, %s111
      %p113 = scmp.eq.s32.totalorder %s49, 0
      %p114 = por %p112, %p113
      %s115 = ssub.s32 %s51, %s58
      %p116 = scmp.eq.s32.totalorder %s115, 0
      %s118 = sadd.s32 %s117, 1
      %s119 = scalar_select %p116, %s117, %s118
      %p122 = pneg %p116
      %p123 = scmp.eq.s32.totalorder %s43, 3
      %p124 = por %p122, %p123
      %p125 = scmp.ne.s32.totalorder %s117, %s120
      %p126 = scmp.eq.s32.totalorder %s43, 0
      %p127 = por %p125, %p126
      %p128 = scmp.ne.s32.totalorder %s117, %s120
      %p129 = scmp.eq.s32.totalorder %s48, 3
      %p130 = por %p128, %p129
      %p131 = scmp.ne.s32.totalorder %s120, %s121
      %p132 = scmp.eq.s32.totalorder %s48, 0
      %p133 = por %p131, %p132
      %p134 = scmp.ne.s32.totalorder %s120, %s121
      %p135 = scmp.eq.s32.totalorder %s49, 3
      %p136 = por %p134, %p135
      %p138 = scmp.ne.s32.totalorder %s121, %s137
      %p139 = scmp.eq.s32.totalorder %s49, 0
      %p140 = por %p138, %p139
      %s141 = ssub.s32 %s51, %s58
      %p142 = scmp.eq.s32.totalorder %s141, 0
      %s144 = sadd.s32 %s143, 1
      %s145 = scalar_select %p142, %s143, %s144
      %p148 = pneg %p142
      %p149 = scmp.eq.s32.totalorder %s43, 3
      %p150 = por %p148, %p149
      %p151 = scmp.ne.s32.totalorder %s143, %s146
      %p152 = scmp.eq.s32.totalorder %s43, 0
      %p153 = por %p151, %p152
      %p154 = scmp.ne.s32.totalorder %s143, %s146
      %p155 = scmp.eq.s32.totalorder %s48, 3
      %p156 = por %p154, %p155
      %p157 = scmp.ne.s32.totalorder %s146, %s147
      %p158 = scmp.eq.s32.totalorder %s48, 0
      %p159 = por %p157, %p158
      %p160 = scmp.ne.s32.totalorder %s146, %s147
      %p161 = scmp.eq.s32.totalorder %s49, 3
      %p162 = por %p160, %p161
      %p164 = scmp.ne.s32.totalorder %s147, %s163
      %p165 = scmp.eq.s32.totalorder %s49, 0
      %p166 = por %p164, %p165
      %s167 = ssub.s32 %s51, %s58
      %p168 = scmp.eq.s32.totalorder %s167, 0
      %s170 = sadd.s32 %s169, 1
      %s171 = scalar_select %p168, %s169, %s170
      %p174 = pneg %p168
      %p175 = scmp.eq.s32.totalorder %s43, 3
      %p176 = por %p174, %p175
      %p177 = scmp.ne.s32.totalorder %s169, %s172
      %p178 = scmp.eq.s32.totalorder %s43, 0
      %p179 = por %p177, %p178
      %p180 = scmp.ne.s32.totalorder %s169, %s172
      %p181 = scmp.eq.s32.totalorder %s48, 3
      %p182 = por %p180, %p181
      %p183 = scmp.ne.s32.totalorder %s172, %s173
      %p184 = scmp.eq.s32.totalorder %s48, 0
      %p185 = por %p183, %p184
      %p186 = scmp.ne.s32.totalorder %s172, %s173
      %p187 = scmp.eq.s32.totalorder %s49, 3
      %p188 = por %p186, %p187
      %p190 = scmp.ne.s32.totalorder %s173, %s189
      %p191 = scmp.eq.s32.totalorder %s49, 0
      %p192 = por %p190, %p191
      %s193 = ssub.s32 %s51, %s58
      %p194 = scmp.eq.s32.totalorder %s193, 0
      %s196 = sadd.s32 %s195, 1
      %s197 = scalar_select %p194, %s195, %s196
      %p200 = pneg %p194
      %p201 = scmp.eq.s32.totalorder %s43, 3
      %p202 = por %p200, %p201
      %p203 = scmp.ne.s32.totalorder %s195, %s198
      %p204 = scmp.eq.s32.totalorder %s43, 0
      %p205 = por %p203, %p204
      %p206 = scmp.ne.s32.totalorder %s195, %s198
      %p207 = scmp.eq.s32.totalorder %s48, 3
      %p208 = por %p206, %p207
      %p209 = scmp.ne.s32.totalorder %s198, %s199
      %p210 = scmp.eq.s32.totalorder %s48, 0
      %p211 = por %p209, %p210
      %p212 = scmp.ne.s32.totalorder %s198, %s199
      %p213 = scmp.eq.s32.totalorder %s49, 3
      %p214 = por %p212, %p213
      %p216 = scmp.ne.s32.totalorder %s199, %s215
      %p217 = scmp.eq.s32.totalorder %s49, 0
      %p218 = por %p216, %p217
      %s219 = ssub.s32 %s51, %s58
      %p220 = scmp.eq.s32.totalorder %s219, 0
      %s222 = sadd.s32 %s221, 1
      %s223 = scalar_select %p220, %s221, %s222
      %p226 = pneg %p220
      %p227 = scmp.eq.s32.totalorder %s43, 3
      %p228 = por %p226, %p227
      %p229 = scmp.ne.s32.totalorder %s221, %s224
      %p230 = scmp.eq.s32.totalorder %s43, 0
      %p231 = por %p229, %p230
      %p232 = scmp.ne.s32.totalorder %s221, %s224
      %p233 = scmp.eq.s32.totalorder %s48, 3
      %p234 = por %p232, %p233
      %p235 = scmp.ne.s32.totalorder %s224, %s225
      %p236 = scmp.eq.s32.totalorder %s48, 0
      %p237 = por %p235, %p236
      %p238 = scmp.ne.s32.totalorder %s224, %s225
      %p239 = scmp.eq.s32.totalorder %s49, 3
      %p240 = por %p238, %p239
      %p242 = scmp.ne.s32.totalorder %s225, %s241
      %p243 = scmp.eq.s32.totalorder %s49, 0
      %p244 = por %p242, %p243
      %s245 = ssub.s32 %s51, %s58
      %p246 = scmp.eq.s32.totalorder %s245, 0
      %s248 = sadd.s32 %s247, 1
      %s249 = scalar_select %p246, %s247, %s248
      %p252 = pneg %p246
      %p253 = scmp.eq.s32.totalorder %s43, 3
      %p254 = por %p252, %p253
      %p255 = scmp.ne.s32.totalorder %s247, %s250
      %p256 = scmp.eq.s32.totalorder %s43, 0
      %p257 = por %p255, %p256
      %p258 = scmp.ne.s32.totalorder %s247, %s250
      %p259 = scmp.eq.s32.totalorder %s48, 3
      %p260 = por %p258, %p259
      %p261 = scmp.ne.s32.totalorder %s250, %s251
      %p262 = scmp.eq.s32.totalorder %s48, 0
      %p263 = por %p261, %p262
      %p264 = scmp.ne.s32.totalorder %s250, %s251
      %p265 = scmp.eq.s32.totalorder %s49, 3
      %p266 = por %p264, %p265
      %p268 = scmp.ne.s32.totalorder %s251, %s267
      %p269 = scmp.eq.s32.totalorder %s49, 0
      %p270 = por %p268, %p269
      %s271 = ssub.s32 %s51, %s58
      %p272 = scmp.eq.s32.totalorder %s271, 0
      %s274 = sadd.s32 %s273, 1
      %s275 = scalar_select %p272, %s273, %s274
      %p278 = pneg %p272
      %p279 = scmp.eq.s32.totalorder %s43, 3
      %p280 = por %p278, %p279
      %p281 = scmp.ne.s32.totalorder %s273, %s276
      %p282 = scmp.eq.s32.totalorder %s43, 0
      %p283 = por %p281, %p282
      %p284 = scmp.ne.s32.totalorder %s273, %s276
      %p285 = scmp.eq.s32.totalorder %s48, 3
      %p286 = por %p284, %p285
      %p287 = scmp.ne.s32.totalorder %s276, %s277
      %p288 = scmp.eq.s32.totalorder %s48, 0
      %p289 = por %p287, %p288
      %p290 = scmp.ne.s32.totalorder %s276, %s277
      %p291 = scmp.eq.s32.totalorder %s49, 3
      %p292 = por %p290, %p291
      %p294 = scmp.ne.s32.totalorder %s277, %s293
      %p295 = scmp.eq.s32.totalorder %s49, 0
      %p296 = por %p294, %p295
      %s297 = ssub.s32 %s51, %s58
      %p298 = scmp.eq.s32.totalorder %s297, 0
      %s300 = sadd.s32 %s299, 1
      %s301 = scalar_select %p298, %s299, %s300
      %p304 = pneg %p298
      %p305 = scmp.eq.s32.totalorder %s43, 3
      %p306 = por %p304, %p305
      %p307 = scmp.ne.s32.totalorder %s299, %s302
      %p308 = scmp.eq.s32.totalorder %s43, 0
      %p309 = por %p307, %p308
      %p310 = scmp.ne.s32.totalorder %s299, %s302
      %p311 = scmp.eq.s32.totalorder %s48, 3
      %p312 = por %p310, %p311
      %p313 = scmp.ne.s32.totalorder %s302, %s303
      %p314 = scmp.eq.s32.totalorder %s48, 0
      %p315 = por %p313, %p314
      %p316 = scmp.ne.s32.totalorder %s302, %s303
      %p317 = scmp.eq.s32.totalorder %s49, 3
      %p318 = por %p316, %p317
      %p320 = scmp.ne.s32.totalorder %s303, %s319
      %p321 = scmp.eq.s32.totalorder %s49, 0
      %p322 = por %p320, %p321
      %s323 = ssub.s32 %s51, %s58
      %p324 = scmp.eq.s32.totalorder %s323, 0
      %s326 = sadd.s32 %s325, 1
      %s327 = scalar_select %p324, %s325, %s326
      %p330 = pneg %p324
      %p331 = scmp.eq.s32.totalorder %s43, 3
      %p332 = por %p330, %p331
      %p333 = scmp.ne.s32.totalorder %s325, %s328
      %p334 = scmp.eq.s32.totalorder %s43, 0
      %p335 = por %p333, %p334
      %p336 = scmp.ne.s32.totalorder %s325, %s328
      %p337 = scmp.eq.s32.totalorder %s48, 3
      %p338 = por %p336, %p337
      %p339 = scmp.ne.s32.totalorder %s328, %s329
      %p340 = scmp.eq.s32.totalorder %s48, 0
      %p341 = por %p339, %p340
      %p342 = scmp.ne.s32.totalorder %s328, %s329
      %p343 = scmp.eq.s32.totalorder %s49, 3
      %p344 = por %p342, %p343
      %p346 = scmp.ne.s32.totalorder %s329, %s345
      %p347 = scmp.eq.s32.totalorder %s49, 0
      %p348 = por %p346, %p347
      %s349 = ssub.s32 %s51, %s58
      %p350 = scmp.eq.s32.totalorder %s349, 0
      %s352 = sadd.s32 %s351, 1
      %s353 = scalar_select %p350, %s351, %s352
      %p356 = pneg %p350
      %p357 = scmp.eq.s32.totalorder %s43, 3
      %p358 = por %p356, %p357
      %p359 = scmp.ne.s32.totalorder %s351, %s354
      %p360 = scmp.eq.s32.totalorder %s43, 0
      %p361 = por %p359, %p360
      %p362 = scmp.ne.s32.totalorder %s351, %s354
      %p363 = scmp.eq.s32.totalorder %s48, 3
      %p364 = por %p362, %p363
      %p365 = scmp.ne.s32.totalorder %s354, %s355
      %p366 = scmp.eq.s32.totalorder %s48, 0
      %p367 = por %p365, %p366
      %p368 = scmp.ne.s32.totalorder %s354, %s355
      %p369 = scmp.eq.s32.totalorder %s49, 3
      %p370 = por %p368, %p369
      %p372 = scmp.ne.s32.totalorder %s355, %s371
      %p373 = scmp.eq.s32.totalorder %s49, 0
      %p374 = por %p372, %p373
      %s375 = ssub.s32 %s51, %s58
      %p376 = scmp.eq.s32.totalorder %s375, 0
      %s378 = sadd.s32 %s377, 1
      %s379 = scalar_select %p376, %s377, %s378
      %p382 = pneg %p376
      %p383 = scmp.eq.s32.totalorder %s43, 3
      %p384 = por %p382, %p383
      %p385 = scmp.ne.s32.totalorder %s377, %s380
      %p386 = scmp.eq.s32.totalorder %s43, 0
      %p387 = por %p385, %p386
      %p388 = scmp.ne.s32.totalorder %s377, %s380
      %p389 = scmp.eq.s32.totalorder %s48, 3
      %p390 = por %p388, %p389
      %p391 = scmp.ne.s32.totalorder %s380, %s381
      %p392 = scmp.eq.s32.totalorder %s48, 0
      %p393 = por %p391, %p392
      %p394 = scmp.ne.s32.totalorder %s380, %s381
      %p395 = scmp.eq.s32.totalorder %s49, 3
      %p396 = por %p394, %p395
      %p398 = scmp.ne.s32.totalorder %s381, %s397
      %p399 = scmp.eq.s32.totalorder %s49, 0
      %p400 = por %p398, %p399
      %s401 = ssub.s32 %s51, %s58
      %p402 = scmp.eq.s32.totalorder %s401, 0
      %s404 = sadd.s32 %s403, 1
      %s405 = scalar_select %p402, %s403, %s404
      %p408 = pneg %p402
      %p409 = scmp.eq.s32.totalorder %s43, 3
      %p410 = por %p408, %p409
      %p411 = scmp.ne.s32.totalorder %s403, %s406
      %p412 = scmp.eq.s32.totalorder %s43, 0
      %p413 = por %p411, %p412
      %p414 = scmp.ne.s32.totalorder %s403, %s406
      %p415 = scmp.eq.s32.totalorder %s48, 3
      %p416 = por %p414, %p415
      %p417 = scmp.ne.s32.totalorder %s406, %s407
      %p418 = scmp.eq.s32.totalorder %s48, 0
      %p419 = por %p417, %p418
      %p420 = scmp.ne.s32.totalorder %s406, %s407
      %p421 = scmp.eq.s32.totalorder %s49, 3
      %p422 = por %p420, %p421
      %p424 = scmp.ne.s32.totalorder %s407, %s423
      %p425 = scmp.eq.s32.totalorder %s49, 0
      %p426 = por %p424, %p425
      %s427 = ssub.s32 %s51, %s58
      %p428 = scmp.eq.s32.totalorder %s427, 0
      %s430 = sadd.s32 %s429, 1
      %s431 = scalar_select %p428, %s429, %s430
      %p434 = pneg %p428
      %p435 = scmp.eq.s32.totalorder %s43, 3
      %p436 = por %p434, %p435
      %p437 = scmp.ne.s32.totalorder %s429, %s432
      %p438 = scmp.eq.s32.totalorder %s43, 0
      %p439 = por %p437, %p438
      %p440 = scmp.ne.s32.totalorder %s429, %s432
      %p441 = scmp.eq.s32.totalorder %s48, 3
      %p442 = por %p440, %p441
      %p443 = scmp.ne.s32.totalorder %s432, %s433
      %p444 = scmp.eq.s32.totalorder %s48, 0
      %p445 = por %p443, %p444
      %p446 = scmp.ne.s32.totalorder %s432, %s433
      %p447 = scmp.eq.s32.totalorder %s49, 3
      %p448 = por %p446, %p447
      %p450 = scmp.ne.s32.totalorder %s433, %s449
      %p451 = scmp.eq.s32.totalorder %s49, 0
      %p452 = por %p450, %p451
      %s453 = ssub.s32 %s51, %s58
      %p454 = scmp.eq.s32.totalorder %s453, 0
      %s456 = sadd.s32 %s455, 1
      %s457 = scalar_select %p454, %s455, %s456
      %p460 = pneg %p454
      %p461 = scmp.eq.s32.totalorder %s43, 3
      %p462 = por %p460, %p461
      %p463 = scmp.ne.s32.totalorder %s455, %s458
      %p464 = scmp.eq.s32.totalorder %s43, 0
      %p465 = por %p463, %p464
      %p466 = scmp.ne.s32.totalorder %s455, %s458
      %p467 = scmp.eq.s32.totalorder %s48, 3
      %p468 = por %p466, %p467
      %p469 = scmp.ne.s32.totalorder %s458, %s459
      %p470 = scmp.eq.s32.totalorder %s48, 0
      %p471 = por %p469, %p470
      %p472 = scmp.ne.s32.totalorder %s458, %s459
      %p473 = scmp.eq.s32.totalorder %s49, 3
      %p474 = por %p472, %p473
      %p476 = scmp.ne.s32.totalorder %s459, %s475
      %p477 = scmp.eq.s32.totalorder %s49, 0
      %p478 = por %p476, %p477
      %s479 = ssub.s32 %s50, %s62
      %p480 = scmp.eq.s32.totalorder %s479, 0
      %s482 = sadd.s32 %s481, 1
      %s483 = scalar_select %p480, %s481, %s482
      %p486 = pneg %p480
      %p487 = scmp.eq.s32.totalorder %s43, 3
      %p488 = por %p486, %p487
      %p489 = scmp.ne.s32.totalorder %s481, %s484
      %p490 = scmp.eq.s32.totalorder %s43, 0
      %p491 = por %p489, %p490
      %p492 = scmp.ne.s32.totalorder %s481, %s484
      %p493 = scmp.eq.s32.totalorder %s48, 3
      %p494 = por %p492, %p493
      %p495 = scmp.ne.s32.totalorder %s484, %s485
      %p496 = scmp.eq.s32.totalorder %s48, 0
      %p497 = por %p495, %p496
      %p498 = scmp.ne.s32.totalorder %s484, %s485
      %p499 = scmp.eq.s32.totalorder %s49, 3
      %p500 = por %p498, %p499
      %p502 = scmp.ne.s32.totalorder %s485, %s501
      %p503 = scmp.eq.s32.totalorder %s49, 0
      %p504 = por %p502, %p503
      %p505 = scmp.le.s32.totalorder 1, %s43
      %p506 = scmp.lt.s32.totalorder %s43, 5
      %p507 = pnand %p505, %p506
      %p508 = pneg %p507
      // Predicated region
      $region9: #{tpu_custom_call.1} parent=5 // pred_check
        _
      $region10: #{tpu_custom_call.1} parent=5 // pred_check_branch
        %510 = sbr.rel (%p507) target = $region12
      $region11: #{tpu_custom_call.1} parent=5 // pred_region
        %s511 = ssub.s32 %s43, 1
      $region12: #{tpu_custom_call.1} parent=5 // pred_fallthru
        _
      %p512 = scmp.lt.s32.totalorder %s43, 4
      // Predicated region
      $region13: #{tpu_custom_call.1} parent=5 // pred_check
        %p513 = pneg %p512
      $region14: #{tpu_custom_call.1} parent=5 // pred_check_branch
        %515 = sbr.rel (%p513) target = $region16
      $region15: #{tpu_custom_call.1} parent=5 // pred_region
        // Predicated region
        $region17: #{tpu_custom_call.1} parent=15 // pred_check
          %p516 = pneg %p75
        $region18: #{tpu_custom_call.1} parent=15 // pred_check_branch
          %518 = sbr.rel (%p516) target = $region20
        $region19: #{tpu_custom_call.1} parent=15 // pred_region
          %s519 = sand.u32 %s65, 1
          %s520 = scalar_lea.sflag [#allocation4], %s519
          %s521 = sand.u32 %s65, 1
          %s522 = smul.addr %s521, 4
          %s523 = scalar_lea.vmem [#allocation3], %s522
          %525 = vsyncadd %s520, 0
          %s526 = smul.addr %s50, 4
          %s527 = scalar_lea.hbm %s0, %s526
          %s529 = sshll.u32 %s527, 4
          %s530 = int_to_ptr.hbm [resolvable:$true] %s529
          %s531 = sshll.u32 %s523, 4
          %s532 = int_to_ptr.vmem [resolvable:$true] %s531
          %534 = dma.hbm_to_vmem [thread:$0]  %s530, 64, %s532, %s520
        $region20: #{tpu_custom_call.1} parent=15 // pred_fallthru
          _
        // Predicated region
        $region21: #{tpu_custom_call.1} parent=15 // pred_check
          %p535 = pneg %p101
        $region22: #{tpu_custom_call.1} parent=15 // pred_check_branch
          %537 = sbr.rel (%p535) target = $region24
        $region23: #{tpu_custom_call.1} parent=15 // pred_region
          %s538 = sand.u32 %s43, 1
          %s539 = scalar_lea.sflag [#allocation7], %s538
          %s540 = sand.u32 %s91, 1
          %s541 = smul.addr %s540, 4
          %s542 = scalar_lea.vmem [#allocation6], %s541
          %544 = vsyncadd %s539, 0
          %s545 = smul.addr %s50, 4
          %s546 = scalar_lea.hbm %s1, %s545
          %s548 = sshll.u32 %s546, 4
          %s549 = int_to_ptr.hbm [resolvable:$true] %s548
          %s550 = sshll.u32 %s542, 4
          %s551 = int_to_ptr.vmem [resolvable:$true] %s550
          %553 = dma.hbm_to_vmem [thread:$0]  %s549, 64, %s551, %s539
        $region24: #{tpu_custom_call.1} parent=15 // pred_fallthru
          _
        // Predicated region
        $region25: #{tpu_custom_call.1} parent=15 // pred_check
          %p554 = pneg %p127
        $region26: #{tpu_custom_call.1} parent=15 // pred_check_branch
          %556 = sbr.rel (%p554) target = $region28
        $region27: #{tpu_custom_call.1} parent=15 // pred_region
          %s557 = sand.u32 %s43, 1
          %s558 = scalar_lea.sflag [#allocation7], %s557
          %s559 = sand.u32 %s117, 1
          %s560 = smul.addr %s559, 128
          %s561 = scalar_lea.vmem [#allocation8], %s560
          %563 = vsyncadd %s558, 0
          %s564 = smul.addr %s51, 32
          %s565 = smul.addr %s564, 4
          %s566 = scalar_lea.hbm %s2, %s565
          %s567 = sshll.u32 %s566, 4
          %s568 = int_to_ptr.hbm [resolvable:$true] %s567
          %s569 = sshll.u32 %s561, 4
          %s570 = int_to_ptr.vmem [resolvable:$true] %s569
          %575 = dma.hbm_to_vmem [thread:$0]  %s568, 2048, %s570, %s558, 128, 128, 8
        $region28: #{tpu_custom_call.1} parent=15 // pred_fallthru
          _
        // Predicated region
        $region29: #{tpu_custom_call.1} parent=15 // pred_check
          %p576 = pneg %p153
        $region30: #{tpu_custom_call.1} parent=15 // pred_check_branch
          %578 = sbr.rel (%p576) target = $region32
        $region31: #{tpu_custom_call.1} parent=15 // pred_region
          %s579 = sand.u32 %s43, 1
          %s580 = scalar_lea.sflag [#allocation10], %s579
          %s581 = sand.u32 %s143, 1
          %s582 = smul.addr %s581, 2
          %s583 = scalar_lea.vmem [#allocation9], %s582
          %585 = vsyncadd %s580, 0
          %s586 = smul.addr %s51, 2
          %s587 = scalar_lea.hbm %s3, %s586
          %s589 = sshll.u32 %s587, 4
          %s590 = int_to_ptr.hbm [resolvable:$true] %s589
          %s591 = sshll.u32 %s583, 4
          %s592 = int_to_ptr.vmem [resolvable:$true] %s591
          %594 = dma.hbm_to_vmem [thread:$0]  %s590, 32, %s592, %s580
        $region32: #{tpu_custom_call.1} parent=15 // pred_fallthru
          _
        // Predicated region
        $region33: #{tpu_custom_call.1} parent=15 // pred_check
          %p595 = pneg %p179
        $region34: #{tpu_custom_call.1} parent=15 // pred_check_branch
          %597 = sbr.rel (%p595) target = $region36
        $region35: #{tpu_custom_call.1} parent=15 // pred_region
          %s598 = sand.u32 %s43, 1
          %s599 = scalar_lea.sflag [#allocation10], %s598
          %s600 = sand.u32 %s169, 1
          %s601 = smul.addr %s600, 128
          %s602 = scalar_lea.vmem [#allocation11], %s601
          %604 = vsyncadd %s599, 0
          %s605 = smul.addr %s51, 32
          %s606 = smul.addr %s605, 4
          %s607 = scalar_lea.hbm %s4, %s606
          %s608 = sshll.u32 %s607, 4
          %s609 = int_to_ptr.hbm [resolvable:$true] %s608
          %s610 = sshll.u32 %s602, 4
          %s611 = int_to_ptr.vmem [resolvable:$true] %s610
          %616 = dma.hbm_to_vmem [thread:$0]  %s609, 2048, %s611, %s599, 128, 128, 8
        $region36: #{tpu_custom_call.1} parent=15 // pred_fallthru
          _
        // Predicated region
        $region37: #{tpu_custom_call.1} parent=15 // pred_check
          %p617 = pneg %p205
        $region38: #{tpu_custom_call.1} parent=15 // pred_check_branch
          %619 = sbr.rel (%p617) target = $region40
        $region39: #{tpu_custom_call.1} parent=15 // pred_region
          %p620 = scmp.lt.s32.totalorder %s51, 1
          %s621 = scalar_select %p620, %s51, 1
          %s622 = smul.addr %s621, 2
          %s623 = scalar_lea.vmem %s5, %s622
        $region40: #{tpu_custom_call.1} parent=15 // pred_fallthru
          _
        // Predicated region
        $region41: #{tpu_custom_call.1} parent=15 // pred_check
          %p624 = pneg %p231
        $region42: #{tpu_custom_call.1} parent=15 // pred_check_branch
          %626 = sbr.rel (%p624) target = $region44
        $region43: #{tpu_custom_call.1} parent=15 // pred_region
          %s627 = sand.u32 %s43, 1
          %s628 = scalar_lea.sflag [#allocation13], %s627
          %s629 = sand.u32 %s221, 1
          %s630 = smul.addr %s629, 128
          %s631 = scalar_lea.vmem [#allocation12], %s630
          %633 = vsyncadd %s628, 0
          %s634 = smul.addr %s51, 32
          %s635 = smul.addr %s634, 4
          %s636 = scalar_lea.hbm %s6, %s635
          %s637 = sshll.u32 %s636, 4
          %s638 = int_to_ptr.hbm [resolvable:$true] %s637
          %s639 = sshll.u32 %s631, 4
          %s640 = int_to_ptr.vmem [resolvable:$true] %s639
          %645 = dma.hbm_to_vmem [thread:$0]  %s638, 2048, %s640, %s628, 64, 64, 4
        $region44: #{tpu_custom_call.1} parent=15 // pred_fallthru
          _
        // Predicated region
        $region45: #{tpu_custom_call.1} parent=15 // pred_check
          %p646 = pneg %p257
        $region46: #{tpu_custom_call.1} parent=15 // pred_check_branch
          %648 = sbr.rel (%p646) target = $region48
        $region47: #{tpu_custom_call.1} parent=15 // pred_region
          %p649 = scmp.lt.s32.totalorder %s51, 1
          %s650 = scalar_select %p649, %s51, 1
          %s651 = scalar_lea.vmem %s7, %s650
        $region48: #{tpu_custom_call.1} parent=15 // pred_fallthru
          _
        // Predicated region
        $region49: #{tpu_custom_call.1} parent=15 // pred_check
          %p652 = pneg %p283
        $region50: #{tpu_custom_call.1} parent=15 // pred_check_branch
          %654 = sbr.rel (%p652) target = $region52
        $region51: #{tpu_custom_call.1} parent=15 // pred_region
          %s655 = sand.u32 %s43, 1
          %s656 = scalar_lea.sflag [#allocation13], %s655
          %s657 = sand.u32 %s273, 1
          %s658 = scalar_lea.vmem [#allocation14], %s657
          %660 = vsyncadd %s656, 0
          %s661 = scalar_lea.hbm %s8, %s51
          %s663 = sshll.u32 %s661, 4
          %s664 = int_to_ptr.hbm [resolvable:$true] %s663
          %s665 = sshll.u32 %s658, 4
          %s666 = int_to_ptr.vmem [resolvable:$true] %s665
          %668 = dma.hbm_to_vmem [thread:$0]  %s664, 16, %s666, %s656
        $region52: #{tpu_custom_call.1} parent=15 // pred_fallthru
          _
        // Predicated region
        $region53: #{tpu_custom_call.1} parent=15 // pred_check
          %p669 = pneg %p309
        $region54: #{tpu_custom_call.1} parent=15 // pred_check_branch
          %671 = sbr.rel (%p669) target = $region56
        $region55: #{tpu_custom_call.1} parent=15 // pred_region
          %p672 = scmp.lt.s32.totalorder %s51, 1
          %s673 = scalar_select %p672, %s51, 1
          %s674 = scalar_lea.vmem %s9, %s673
        $region56: #{tpu_custom_call.1} parent=15 // pred_fallthru
          _
        // Predicated region
        $region57: #{tpu_custom_call.1} parent=15 // pred_check
          %p675 = pneg %p335
        $region58: #{tpu_custom_call.1} parent=15 // pred_check_branch
          %677 = sbr.rel (%p675) target = $region60
        $region59: #{tpu_custom_call.1} parent=15 // pred_region
          %s678 = sand.u32 %s43, 1
          %s679 = scalar_lea.sflag [#allocation16], %s678
          %s680 = sand.u32 %s325, 1
          %s681 = smul.addr %s680, 64
          %s682 = scalar_lea.vmem [#allocation15], %s681
          %684 = vsyncadd %s679, 0
          %s685 = smul.addr %s51, 16
          %s686 = smul.addr %s685, 4
          %s687 = scalar_lea.hbm %s10, %s686
          %s688 = sshll.u32 %s687, 4
          %s689 = int_to_ptr.hbm [resolvable:$true] %s688
          %s690 = sshll.u32 %s682, 4
          %s691 = int_to_ptr.vmem [resolvable:$true] %s690
          %696 = dma.hbm_to_vmem [thread:$0]  %s689, 1024, %s691, %s679, 64, 64, 4
        $region60: #{tpu_custom_call.1} parent=15 // pred_fallthru
          _
        // Predicated region
        $region61: #{tpu_custom_call.1} parent=15 // pred_check
          %p697 = pneg %p361
        $region62: #{tpu_custom_call.1} parent=15 // pred_check_branch
          %699 = sbr.rel (%p697) target = $region64
        $region63: #{tpu_custom_call.1} parent=15 // pred_region
          %p700 = scmp.lt.s32.totalorder %s51, 1
          %s701 = scalar_select %p700, %s51, 1
          %s702 = scalar_lea.vmem %s11, %s701
        $region64: #{tpu_custom_call.1} parent=15 // pred_fallthru
          _
        // Predicated region
        $region65: #{tpu_custom_call.1} parent=15 // pred_check
          %p703 = pneg %p387
        $region66: #{tpu_custom_call.1} parent=15 // pred_check_branch
          %705 = sbr.rel (%p703) target = $region68
        $region67: #{tpu_custom_call.1} parent=15 // pred_region
          %s706 = sand.u32 %s43, 1
          %s707 = scalar_lea.sflag [#allocation16], %s706
          %s708 = sand.u32 %s377, 1
          %s709 = smul.addr %s708, 64
          %s710 = scalar_lea.vmem [#allocation17], %s709
          %712 = vsyncadd %s707, 0
          %s713 = smul.addr %s51, 16
          %s714 = smul.addr %s713, 4
          %s715 = scalar_lea.hbm %s12, %s714
          %s716 = sshll.u32 %s715, 4
          %s717 = int_to_ptr.hbm [resolvable:$true] %s716
          %s718 = sshll.u32 %s710, 4
          %s719 = int_to_ptr.vmem [resolvable:$true] %s718
          %724 = dma.hbm_to_vmem [thread:$0]  %s717, 1024, %s719, %s707, 64, 64, 4
        $region68: #{tpu_custom_call.1} parent=15 // pred_fallthru
          _
        // Predicated region
        $region69: #{tpu_custom_call.1} parent=15 // pred_check
          %p725 = pneg %p413
        $region70: #{tpu_custom_call.1} parent=15 // pred_check_branch
          %727 = sbr.rel (%p725) target = $region72
        $region71: #{tpu_custom_call.1} parent=15 // pred_region
          %p728 = scmp.lt.s32.totalorder %s51, 1
          %s729 = scalar_select %p728, %s51, 1
          %s730 = scalar_lea.vmem %s13, %s729
        $region72: #{tpu_custom_call.1} parent=15 // pred_fallthru
          _
        // Predicated region
        $region73: #{tpu_custom_call.1} parent=15 // pred_check
          %p731 = pneg %p439
        $region74: #{tpu_custom_call.1} parent=15 // pred_check_branch
          %733 = sbr.rel (%p731) target = $region76
        $region75: #{tpu_custom_call.1} parent=15 // pred_region
          %s734 = sand.u32 %s429, 1
          %s735 = scalar_lea.sflag [#allocation19], %s734
          %s736 = sand.u32 %s429, 1
          %s737 = scalar_lea.vmem [#allocation18], %s736
          %739 = vsyncadd %s735, 0
          %s740 = scalar_lea.hbm %s14, %s51
          %s742 = sshll.u32 %s740, 4
          %s743 = int_to_ptr.hbm [resolvable:$true] %s742
          %s744 = sshll.u32 %s737, 4
          %s745 = int_to_ptr.vmem [resolvable:$true] %s744
          %747 = dma.hbm_to_vmem [thread:$0]  %s743, 16, %s745, %s735
        $region76: #{tpu_custom_call.1} parent=15 // pred_fallthru
          _
        // Predicated region
        $region77: #{tpu_custom_call.1} parent=15 // pred_check
          %p748 = pneg %p465
        $region78: #{tpu_custom_call.1} parent=15 // pred_check_branch
          %750 = sbr.rel (%p748) target = $region80
        $region79: #{tpu_custom_call.1} parent=15 // pred_region
          %p751 = scmp.lt.s32.totalorder %s51, 1
          %s752 = scalar_select %p751, %s51, 1
          %s753 = scalar_lea.vmem %s15, %s752
        $region80: #{tpu_custom_call.1} parent=15 // pred_fallthru
          _
      $region16: #{tpu_custom_call.1} parent=5 // pred_fallthru
        _
      %p754 = scmp.le.s32.totalorder 1, %s43
      %p755 = scmp.lt.s32.totalorder %s43, 5
      %p756 = pnand %p754, %p755
      %p757 = pneg %p756
      // Predicated region
      $region81: #{tpu_custom_call.1} parent=5 // pred_check
        _
      $region82: #{tpu_custom_call.1} parent=5 // pred_check_branch
        %759 = sbr.rel (%p756) target = $region84
      $region83: #{tpu_custom_call.1} parent=5 // pred_region
        %s760 = ssub.s32 %s43, 1
        %s761 = sand.u32 %s68, 1
        %s762 = scalar_lea.sflag [#allocation4], %s761
        %s763 = sand.u32 %s68, 1
        %s764 = smul.addr %s763, 4
        %s765 = scalar_lea.vmem [#allocation3], %s764
        // Predicated region
        $region85: #{tpu_custom_call.1} parent=83 // pred_check
          %p766 = pneg %p81
        $region86: #{tpu_custom_call.1} parent=83 // pred_check_branch
          %768 = sbr.rel (%p766) target = $region88
        $region87: #{tpu_custom_call.1} parent=83 // pred_region
          %770 = dma.done %s762, 64
        $region88: #{tpu_custom_call.1} parent=83 // pred_fallthru
          _
        %s771 = sand.u32 %s48, 1
        %s772 = scalar_lea.sflag [#allocation7], %s771
        %s773 = sand.u32 %s94, 1
        %s774 = smul.addr %s773, 4
        %s775 = scalar_lea.vmem [#allocation6], %s774
        // Predicated region
        $region89: #{tpu_custom_call.1} parent=83 // pred_check
          %p776 = pneg %p107
        $region90: #{tpu_custom_call.1} parent=83 // pred_check_branch
          %778 = sbr.rel (%p776) target = $region92
        $region91: #{tpu_custom_call.1} parent=83 // pred_region
          %780 = dma.done %s772, 64
        $region92: #{tpu_custom_call.1} parent=83 // pred_fallthru
          _
        %s781 = sand.u32 %s48, 1
        %s782 = scalar_lea.sflag [#allocation7], %s781
        %s783 = sand.u32 %s120, 1
        %s784 = smul.addr %s783, 128
        %s785 = scalar_lea.vmem [#allocation8], %s784
        // Predicated region
        $region93: #{tpu_custom_call.1} parent=83 // pred_check
          %p786 = pneg %p133
        $region94: #{tpu_custom_call.1} parent=83 // pred_check_branch
          %788 = sbr.rel (%p786) target = $region96
        $region95: #{tpu_custom_call.1} parent=83 // pred_region
          %790 = dma.done %s782, 2048
        $region96: #{tpu_custom_call.1} parent=83 // pred_fallthru
          _
        %s791 = sand.u32 %s48, 1
        %s792 = scalar_lea.sflag [#allocation10], %s791
        %s793 = sand.u32 %s146, 1
        %s794 = smul.addr %s793, 2
        %s795 = scalar_lea.vmem [#allocation9], %s794
        // Predicated region
        $region97: #{tpu_custom_call.1} parent=83 // pred_check
          %p796 = pneg %p159
        $region98: #{tpu_custom_call.1} parent=83 // pred_check_branch
          %798 = sbr.rel (%p796) target = $region100
        $region99: #{tpu_custom_call.1} parent=83 // pred_region
          %800 = dma.done %s792, 32
        $region100: #{tpu_custom_call.1} parent=83 // pred_fallthru
          _
        %s801 = sand.u32 %s48, 1
        %s802 = scalar_lea.sflag [#allocation10], %s801
        %s803 = sand.u32 %s172, 1
        %s804 = smul.addr %s803, 128
        %s805 = scalar_lea.vmem [#allocation11], %s804
        // Predicated region
        $region101: #{tpu_custom_call.1} parent=83 // pred_check
          %p806 = pneg %p185
        $region102: #{tpu_custom_call.1} parent=83 // pred_check_branch
          %808 = sbr.rel (%p806) target = $region104
        $region103: #{tpu_custom_call.1} parent=83 // pred_region
          %810 = dma.done %s802, 2048
        $region104: #{tpu_custom_call.1} parent=83 // pred_fallthru
          _
        %s811 = sand.u32 %s48, 1
        %s812 = scalar_lea.sflag [#allocation13], %s811
        %s813 = sand.u32 %s224, 1
        %s814 = smul.addr %s813, 128
        %s815 = scalar_lea.vmem [#allocation12], %s814
        // Predicated region
        $region105: #{tpu_custom_call.1} parent=83 // pred_check
          %p816 = pneg %p237
        $region106: #{tpu_custom_call.1} parent=83 // pred_check_branch
          %818 = sbr.rel (%p816) target = $region108
        $region107: #{tpu_custom_call.1} parent=83 // pred_region
          %820 = dma.done %s812, 2048
        $region108: #{tpu_custom_call.1} parent=83 // pred_fallthru
          _
        %s821 = sand.u32 %s48, 1
        %s822 = scalar_lea.sflag [#allocation13], %s821
        %s823 = sand.u32 %s276, 1
        %s824 = scalar_lea.vmem [#allocation14], %s823
        // Predicated region
        $region109: #{tpu_custom_call.1} parent=83 // pred_check
          %p825 = pneg %p289
        $region110: #{tpu_custom_call.1} parent=83 // pred_check_branch
          %827 = sbr.rel (%p825) target = $region112
        $region111: #{tpu_custom_call.1} parent=83 // pred_region
          %829 = dma.done %s822, 16
        $region112: #{tpu_custom_call.1} parent=83 // pred_fallthru
          _
        %s830 = sand.u32 %s48, 1
        %s831 = scalar_lea.sflag [#allocation16], %s830
        %s832 = sand.u32 %s328, 1
        %s833 = smul.addr %s832, 64
        %s834 = scalar_lea.vmem [#allocation15], %s833
        // Predicated region
        $region113: #{tpu_custom_call.1} parent=83 // pred_check
          %p835 = pneg %p341
        $region114: #{tpu_custom_call.1} parent=83 // pred_check_branch
          %837 = sbr.rel (%p835) target = $region116
        $region115: #{tpu_custom_call.1} parent=83 // pred_region
          %839 = dma.done %s831, 1024
        $region116: #{tpu_custom_call.1} parent=83 // pred_fallthru
          _
        %s840 = sand.u32 %s48, 1
        %s841 = scalar_lea.sflag [#allocation16], %s840
        %s842 = sand.u32 %s380, 1
        %s843 = smul.addr %s842, 64
        %s844 = scalar_lea.vmem [#allocation17], %s843
        // Predicated region
        $region117: #{tpu_custom_call.1} parent=83 // pred_check
          %p845 = pneg %p393
        $region118: #{tpu_custom_call.1} parent=83 // pred_check_branch
          %847 = sbr.rel (%p845) target = $region120
        $region119: #{tpu_custom_call.1} parent=83 // pred_region
          %849 = dma.done %s841, 1024
        $region120: #{tpu_custom_call.1} parent=83 // pred_fallthru
          _
        %s850 = sand.u32 %s432, 1
        %s851 = scalar_lea.sflag [#allocation19], %s850
        %s852 = sand.u32 %s432, 1
        %s853 = scalar_lea.vmem [#allocation18], %s852
        // Predicated region
        $region121: #{tpu_custom_call.1} parent=83 // pred_check
          %p854 = pneg %p445
        $region122: #{tpu_custom_call.1} parent=83 // pred_check_branch
          %856 = sbr.rel (%p854) target = $region124
        $region123: #{tpu_custom_call.1} parent=83 // pred_region
          %858 = dma.done %s851, 16
        $region124: #{tpu_custom_call.1} parent=83 // pred_fallthru
          _
        %s859 = sand.u32 %s68, 1
        %s860 = scalar_lea.sflag [#allocation4], %s859
        %s861 = sand.u32 %s68, 1
        %s862 = smul.addr %s861, 4
        %s863 = scalar_lea.vmem [#allocation3], %s862
        %p864 = pneg %p81
        %p865 = pneg %p78
        %s866 = sand.u32 %s48, 1
        %s867 = scalar_lea.sflag [#allocation7], %s866
        %s868 = sand.u32 %s94, 1
        %s869 = smul.addr %s868, 4
        %s870 = scalar_lea.vmem [#allocation6], %s869
        %p871 = pneg %p107
        %p872 = pneg %p104
        %s873 = sand.u32 %s48, 1
        %s874 = scalar_lea.sflag [#allocation7], %s873
        %s875 = sand.u32 %s120, 1
        %s876 = smul.addr %s875, 128
        %s877 = scalar_lea.vmem [#allocation8], %s876
        %p878 = pneg %p133
        %p879 = pneg %p130
        %s880 = sand.u32 %s48, 1
        %s881 = scalar_lea.sflag [#allocation10], %s880
        %s882 = sand.u32 %s146, 1
        %s883 = smul.addr %s882, 2
        %s884 = scalar_lea.vmem [#allocation9], %s883
        %p885 = pneg %p159
        %p886 = pneg %p156
        %s887 = sand.u32 %s48, 1
        %s888 = scalar_lea.sflag [#allocation10], %s887
        %s889 = sand.u32 %s172, 1
        %s890 = smul.addr %s889, 128
        %s891 = scalar_lea.vmem [#allocation11], %s890
        %p892 = pneg %p185
        %p893 = pneg %p182
        %p894 = scmp.lt.s32.totalorder %s53, 1
        %s895 = scalar_select %p894, %s53, 1
        %s896 = smul.addr %s895, 2
        %s897 = scalar_lea.vmem %s5, %s896
        %p898 = pneg %p211
        %p899 = pneg %p208
        %s900 = sand.u32 %s48, 1
        %s901 = scalar_lea.sflag [#allocation13], %s900
        %s902 = sand.u32 %s224, 1
        %s903 = smul.addr %s902, 128
        %s904 = scalar_lea.vmem [#allocation12], %s903
        %p905 = pneg %p237
        %p906 = pneg %p234
        %p907 = scmp.lt.s32.totalorder %s53, 1
        %s908 = scalar_select %p907, %s53, 1
        %s909 = scalar_lea.vmem %s7, %s908
        %p910 = pneg %p263
        %p911 = pneg %p260
        %s912 = sand.u32 %s48, 1
        %s913 = scalar_lea.sflag [#allocation13], %s912
        %s914 = sand.u32 %s276, 1
        %s915 = scalar_lea.vmem [#allocation14], %s914
        %p916 = pneg %p289
        %p917 = pneg %p286
        %p918 = scmp.lt.s32.totalorder %s53, 1
        %s919 = scalar_select %p918, %s53, 1
        %s920 = scalar_lea.vmem %s9, %s919
        %p921 = pneg %p315
        %p922 = pneg %p312
        %s923 = sand.u32 %s48, 1
        %s924 = scalar_lea.sflag [#allocation16], %s923
        %s925 = sand.u32 %s328, 1
        %s926 = smul.addr %s925, 64
        %s927 = scalar_lea.vmem [#allocation15], %s926
        %p928 = pneg %p341
        %p929 = pneg %p338
        %p930 = scmp.lt.s32.totalorder %s53, 1
        %s931 = scalar_select %p930, %s53, 1
        %s932 = scalar_lea.vmem %s11, %s931
        %p933 = pneg %p367
        %p934 = pneg %p364
        %s935 = sand.u32 %s48, 1
        %s936 = scalar_lea.sflag [#allocation16], %s935
        %s937 = sand.u32 %s380, 1
        %s938 = smul.addr %s937, 64
        %s939 = scalar_lea.vmem [#allocation17], %s938
        %p940 = pneg %p393
        %p941 = pneg %p390
        %p942 = scmp.lt.s32.totalorder %s53, 1
        %s943 = scalar_select %p942, %s53, 1
        %s944 = scalar_lea.vmem %s13, %s943
        %p945 = pneg %p419
        %p946 = pneg %p416
        %s947 = sand.u32 %s432, 1
        %s948 = scalar_lea.sflag [#allocation19], %s947
        %s949 = sand.u32 %s432, 1
        %s950 = scalar_lea.vmem [#allocation18], %s949
        %p951 = pneg %p445
        %p952 = pneg %p442
        %p953 = scmp.lt.s32.totalorder %s53, 1
        %s954 = scalar_select %p953, %s53, 1
        %s955 = scalar_lea.vmem %s15, %s954
        %p956 = pneg %p471
        %p957 = pneg %p468
        %p958 = pneg %p497
        %p959 = pneg %p494
        %s960 = sand.u32 %s484, 1
        %s961 = scalar_lea.sflag [#allocation5], %s960
        %s962 = sand.u32 %s484, 1
        %s963 = smul.addr %s962, 4
        %s964 = scalar_lea.vmem [#allocation20], %s963
        %p965 = scmp.lt.s32.totalorder %s53, 1
        %s966 = scalar_select %p965, %s53, 1
        %s967 = smul.addr %s966, 2
        %s968 = scalar_lea.vmem %s5, %s967
        %p969 = scmp.lt.s32.totalorder %s53, 1
        %s970 = scalar_select %p969, %s53, 1
        %s971 = scalar_lea.vmem %s7, %s970
        %p972 = scmp.lt.s32.totalorder %s53, 1
        %s973 = scalar_select %p972, %s53, 1
        %s974 = scalar_lea.vmem %s9, %s973
        %p975 = scmp.lt.s32.totalorder %s53, 1
        %s976 = scalar_select %p975, %s53, 1
        %s977 = scalar_lea.vmem %s11, %s976
        %p978 = scmp.lt.s32.totalorder %s53, 1
        %s979 = scalar_select %p978, %s53, 1
        %s980 = scalar_lea.vmem %s13, %s979
        %p981 = scmp.lt.s32.totalorder %s53, 1
        %s982 = scalar_select %p981, %s53, 1
        %s983 = scalar_lea.vmem %s15, %s982
        %p985 = scmp.eq.s32.totalorder %s53, 0
        // Predicated region
        $region125: #{tpu_custom_call.1} parent=83 // pred_check
          %p986 = pneg %p985
        $region126: #{tpu_custom_call.1} parent=83 // pred_check_branch
          %988 = sbr.rel (%p986) target = $region128
        $region127: #{tpu_custom_call.1} parent=83 // pred_region
          %v989 = vld [vmem:[%s765] sm:$0xf]
          %990 = vst [vmem:[%s964] sm:$0xf] %v989
        $region128: #{tpu_custom_call.1} parent=83 // pred_fallthru
          _
        %v991 = vld [vmem:[%s964] sm:$0xf]
        %v992 = vld [vmem:[%s775] sm:$0xf]
        %v993 = vunpack.c.l.bf16 %v991
        %v994 = vld [vmem:[%s785] sm:$0xff]
        %v995 = vld [vmem:[%s785 + $0x8] sm:$0xff]
        %v996 = vld [vmem:[%s785 + $0x10] sm:$0xff]
        %v997 = vld [vmem:[%s785 + $0x18] sm:$0xff]
        %v998 = vld [vmem:[%s785 + $0x20] sm:$0xff]
        %v999 = vld [vmem:[%s785 + $0x28] sm:$0xff]
        %v1000 = vld [vmem:[%s785 + $0x30] sm:$0xff]
        %v1001 = vld [vmem:[%s785 + $0x38] sm:$0xff]
        %v1002 = vld [vmem:[%s785 + $0x40] sm:$0xff]
        %v1003 = vld [vmem:[%s785 + $0x48] sm:$0xff]
        %v1004 = vld [vmem:[%s785 + $0x50] sm:$0xff]
        %v1005 = vld [vmem:[%s785 + $0x58] sm:$0xff]
        %v1006 = vld [vmem:[%s785 + $0x60] sm:$0xff]
        %v1007 = vld [vmem:[%s785 + $0x68] sm:$0xff]
        %v1008 = vld [vmem:[%s785 + $0x70] sm:$0xff]
        %v1009 = vld [vmem:[%s785 + $0x78] sm:$0xff]
        %v1010 = vld [vmem:[%s795] sm:$0x3]
        %v1012 = vperm.slane %v1010, 0
        %v1013 = vperm.slane %v1010, 1
        %v1032 = vunpack.c.l.b16 %v994
        %v1033 = vunpack.c.h.b16 %v994
        %v1034 = vunpack.c.l.b16 %v995
        %v1035 = vunpack.c.h.b16 %v995
        %v1036 = vunpack.c.l.b16 %v996
        %v1037 = vunpack.c.h.b16 %v996
        %v1038 = vunpack.c.l.b16 %v997
        %v1039 = vunpack.c.h.b16 %v997
        %v1040 = vunpack.c.l.b16 %v998
        %v1041 = vunpack.c.h.b16 %v998
        %v1042 = vunpack.c.l.b16 %v999
        %v1043 = vunpack.c.h.b16 %v999
        %v1044 = vunpack.c.l.b16 %v1000
        %v1045 = vunpack.c.h.b16 %v1000
        %v1046 = vunpack.c.l.b16 %v1001
        %v1047 = vunpack.c.h.b16 %v1001
        %v1048 = vunpack.c.l.b16 %v1002
        %v1049 = vunpack.c.h.b16 %v1002
        %v1050 = vunpack.c.l.b16 %v1003
        %v1051 = vunpack.c.h.b16 %v1003
        %v1052 = vunpack.c.l.b16 %v1004
        %v1053 = vunpack.c.h.b16 %v1004
        %v1054 = vunpack.c.l.b16 %v1005
        %v1055 = vunpack.c.h.b16 %v1005
        %v1056 = vunpack.c.l.b16 %v1006
        %v1057 = vunpack.c.h.b16 %v1006
        %v1058 = vunpack.c.l.b16 %v1007
        %v1059 = vunpack.c.h.b16 %v1007
        %v1060 = vunpack.c.l.b16 %v1008
        %v1061 = vunpack.c.h.b16 %v1008
        %v1062 = vunpack.c.l.b16 %v1009
        %v1063 = vunpack.c.h.b16 %v1009
        %v1064 = vpack.c.b16 %v1034, %v1032
        %v1065 = vpack.c.b16 %v1035, %v1033
        %v1066 = vpack.c.b16 %v1038, %v1036
        %v1067 = vpack.c.b16 %v1039, %v1037
        %v1068 = vpack.c.b16 %v1042, %v1040
        %v1069 = vpack.c.b16 %v1043, %v1041
        %v1070 = vpack.c.b16 %v1046, %v1044
        %v1071 = vpack.c.b16 %v1047, %v1045
        %v1072 = vpack.c.b16 %v1050, %v1048
        %v1073 = vpack.c.b16 %v1051, %v1049
        %v1074 = vpack.c.b16 %v1054, %v1052
        %v1075 = vpack.c.b16 %v1055, %v1053
        %v1076 = vpack.c.b16 %v1058, %v1056
        %v1077 = vpack.c.b16 %v1059, %v1057
        %v1078 = vpack.c.b16 %v1062, %v1060
        %v1079 = vpack.c.b16 %v1063, %v1061
        %1096 = vmatpush.bf16.msra.mxu0 %v1078
        %1097 = vmatpush.bf16.msra.mxu0 %v1076
        %1098 = vmatpush.bf16.msra.mxu0 %v1074
        %1099 = vmatpush.bf16.msra.mxu0 %v1072
        %1100 = vmatpush.bf16.msra.mxu0 %v1070
        %1101 = vmatpush.bf16.msra.mxu0 %v1068
        %1102 = vmatpush.bf16.msra.mxu0 %v1066
        %1103 = vmatpush.bf16.msra.mxu0 %v1064
        %1104 = vmatmul.bf16.gmra.mxu0 %v991
        %v1105 = vpop.f32.mrf.mxu0
        %v1106 = vadd.f32 %v1012, %v1105
        %v1107 = vpop.f32.mrf.mxu0
        %1108 = vdwg.mxu0
        %1109 = vmatpush.bf16.msra.mxu0 %v1079
        %1110 = vmatpush.bf16.msra.mxu0 %v1077
        %1111 = vmatpush.bf16.msra.mxu0 %v1075
        %1112 = vmatpush.bf16.msra.mxu0 %v1073
        %1113 = vmatpush.bf16.msra.mxu0 %v1071
        %1114 = vmatpush.bf16.msra.mxu0 %v1069
        %1115 = vmatpush.bf16.msra.mxu0 %v1067
        %1116 = vmatpush.bf16.msra.mxu0 %v1065
        %1117 = vmatmul.bf16.gmra.mxu0 %v991
        %v1118 = vpop.f32.mrf.mxu0
        %v1119 = vadd.f32 %v1013, %v1118
        %v1120 = vpop.f32.mrf.mxu0
        %1121 = vdwg.mxu0
        %v1122 = vld [vmem:[%s805] sm:$0xff]
        %v1123 = vld [vmem:[%s805 + $0x8] sm:$0xff]
        %v1124 = vld [vmem:[%s805 + $0x10] sm:$0xff]
        %v1125 = vld [vmem:[%s805 + $0x18] sm:$0xff]
        %v1126 = vld [vmem:[%s805 + $0x20] sm:$0xff]
        %v1127 = vld [vmem:[%s805 + $0x28] sm:$0xff]
        %v1128 = vld [vmem:[%s805 + $0x30] sm:$0xff]
        %v1129 = vld [vmem:[%s805 + $0x38] sm:$0xff]
        %v1130 = vld [vmem:[%s805 + $0x40] sm:$0xff]
        %v1131 = vld [vmem:[%s805 + $0x48] sm:$0xff]
        %v1132 = vld [vmem:[%s805 + $0x50] sm:$0xff]
        %v1133 = vld [vmem:[%s805 + $0x58] sm:$0xff]
        %v1134 = vld [vmem:[%s805 + $0x60] sm:$0xff]
        %v1135 = vld [vmem:[%s805 + $0x68] sm:$0xff]
        %v1136 = vld [vmem:[%s805 + $0x70] sm:$0xff]
        %v1137 = vld [vmem:[%s805 + $0x78] sm:$0xff]
        %v1138 = vld [vmem:[%s968] sm:$0x3]
        %v1140 = vperm.slane %v1138, 0
        %v1141 = vperm.slane %v1138, 1
        %v1160 = vunpack.c.l.b16 %v1122
        %v1161 = vunpack.c.h.b16 %v1122
        %v1162 = vunpack.c.l.b16 %v1123
        %v1163 = vunpack.c.h.b16 %v1123
        %v1164 = vunpack.c.l.b16 %v1124
        %v1165 = vunpack.c.h.b16 %v1124
        %v1166 = vunpack.c.l.b16 %v1125
        %v1167 = vunpack.c.h.b16 %v1125
        %v1168 = vunpack.c.l.b16 %v1126
        %v1169 = vunpack.c.h.b16 %v1126
        %v1170 = vunpack.c.l.b16 %v1127
        %v1171 = vunpack.c.h.b16 %v1127
        %v1172 = vunpack.c.l.b16 %v1128
        %v1173 = vunpack.c.h.b16 %v1128
        %v1174 = vunpack.c.l.b16 %v1129
        %v1175 = vunpack.c.h.b16 %v1129
        %v1176 = vunpack.c.l.b16 %v1130
        %v1177 = vunpack.c.h.b16 %v1130
        %v1178 = vunpack.c.l.b16 %v1131
        %v1179 = vunpack.c.h.b16 %v1131
        %v1180 = vunpack.c.l.b16 %v1132
        %v1181 = vunpack.c.h.b16 %v1132
        %v1182 = vunpack.c.l.b16 %v1133
        %v1183 = vunpack.c.h.b16 %v1133
        %v1184 = vunpack.c.l.b16 %v1134
        %v1185 = vunpack.c.h.b16 %v1134
        %v1186 = vunpack.c.l.b16 %v1135
        %v1187 = vunpack.c.h.b16 %v1135
        %v1188 = vunpack.c.l.b16 %v1136
        %v1189 = vunpack.c.h.b16 %v1136
        %v1190 = vunpack.c.l.b16 %v1137
        %v1191 = vunpack.c.h.b16 %v1137
        %v1192 = vpack.c.b16 %v1162, %v1160
        %v1193 = vpack.c.b16 %v1163, %v1161
        %v1194 = vpack.c.b16 %v1166, %v1164
        %v1195 = vpack.c.b16 %v1167, %v1165
        %v1196 = vpack.c.b16 %v1170, %v1168
        %v1197 = vpack.c.b16 %v1171, %v1169
        %v1198 = vpack.c.b16 %v1174, %v1172
        %v1199 = vpack.c.b16 %v1175, %v1173
        %v1200 = vpack.c.b16 %v1178, %v1176
        %v1201 = vpack.c.b16 %v1179, %v1177
        %v1202 = vpack.c.b16 %v1182, %v1180
        %v1203 = vpack.c.b16 %v1183, %v1181
        %v1204 = vpack.c.b16 %v1186, %v1184
        %v1205 = vpack.c.b16 %v1187, %v1185
        %v1206 = vpack.c.b16 %v1190, %v1188
        %v1207 = vpack.c.b16 %v1191, %v1189
        %1224 = vmatpush.bf16.msra.mxu0 %v1206
        %1225 = vmatpush.bf16.msra.mxu0 %v1204
        %1226 = vmatpush.bf16.msra.mxu0 %v1202
        %1227 = vmatpush.bf16.msra.mxu0 %v1200
        %1228 = vmatpush.bf16.msra.mxu0 %v1198
        %1229 = vmatpush.bf16.msra.mxu0 %v1196
        %1230 = vmatpush.bf16.msra.mxu0 %v1194
        %1231 = vmatpush.bf16.msra.mxu0 %v1192
        %1232 = vmatmul.bf16.gmra.mxu0 %v992
        %v1233 = vpop.f32.mrf.mxu0
        %v1234 = vadd.f32 %v1140, %v1233
        %v1235 = vpop.f32.mrf.mxu0
        %1236 = vdwg.mxu0
        %1237 = vmatpush.bf16.msra.mxu0 %v1207
        %1238 = vmatpush.bf16.msra.mxu0 %v1205
        %1239 = vmatpush.bf16.msra.mxu0 %v1203
        %1240 = vmatpush.bf16.msra.mxu0 %v1201
        %1241 = vmatpush.bf16.msra.mxu0 %v1199
        %1242 = vmatpush.bf16.msra.mxu0 %v1197
        %1243 = vmatpush.bf16.msra.mxu0 %v1195
        %1244 = vmatpush.bf16.msra.mxu0 %v1193
        %1245 = vmatmul.bf16.gmra.mxu0 %v992
        %v1246 = vpop.f32.mrf.mxu0
        %v1247 = vadd.f32 %v1141, %v1246
        %v1248 = vpop.f32.mrf.mxu0
        %1249 = vdwg.mxu0
        %v1250 = vpack.c.bf16 %v1119, %v1106
        %v1251 = vunpack.c.l.bf16 %v1250
        %v1252 = vunpack.c.h.bf16 %v1250
        %v1253 = vmul.f32 %v1251, 0.25
        %v1254 = vmul.f32 %v1252, 0.25
        %v1255 = vpack.c.bf16 %v1254, %v1253
        %v1256 = vpack.c.bf16 %v1247, %v1234
        %v1257 = vlaneseq
        %v1258 = vshrl.u32 %v1257, 7
        %v1259 = vlaneseq
        %v1260 = vand.u32 %v1259, 127
        %vm1261 = vcmp.lt.s32.totalorder %v1260, %v1258
        %vm1262 = vcmp.gt.s32.totalorder %v1258, 0
        %1263 = vmatpush.bf16.xpose.msra.mxu0 0
        %1264 = vmatpush.bf16.xpose.msra.mxu0 0
        %1265 = vmatpush.bf16.xpose.msra.mxu0 0
        %1266 = vmatpush.bf16.xpose.msra.mxu0 0
        %1267 = vmatpush.bf16.xpose.msra.mxu0 0
        %1268 = vmatpush.bf16.xpose.msra.mxu0 0
        %1269 = vmatpush.bf16.xpose.msra.mxu0 0
        %1270 = vmatpush.bf16.xpose.msra.mxu0 %v1250
        %1271 = vmatmul.bf16.gmra.mxu0 %v1255
        %v1272 = vpop.f32.mrf.mxu0
        %v1273 = vadd.f32 0.0, %v1272
        %v1274 = vpop.f32.mrf.mxu0
        %1275 = vdwg.mxu0
        %v1276 = vsel %vm1261, %v1273, -1e+32
        %vm1277 = vcmask 64512
        %v1278 = vsel %vm1277, %v1276, -inf
        %1279 = vmax.xlane.f32.xlu0 %v1278
        %v1280 = vpop.xlane.xlu0 %1279
        %v1281 = vsub.f32 %v1276, %v1280
        %v1282 = vmul.f32 %v1281, 1.442695
        %v1283 = vpow.pop %v1282
        %v1284 = vsel %vm1277, %v1283, 0.0
        %1285 = vadd.xlane.f32.xlu0 %v1284
        %v1286 = vpop.xlane.xlu0 %1285
        %v1287 = vrcp.pop %v1286
        %v1288 = vmul.f32 %v1283, %v1287
        %v1289 = vsel %vm1262, %v1288, 0.0
        %v1290 = vpack.c.bf16 %v1289, %v1289
        %v1292 = vsel %vm1277, %v1290, 0
        %vm1294 = vcmask 1043456
        %v1296 = vsel %vm1294, %v1256, 0
        %1298 = vmatpush.bf16.msra.mxu0 0
        %1299 = vmatpush.bf16.msra.mxu0 0
        %1300 = vmatpush.bf16.msra.mxu0 0
        %1301 = vmatpush.bf16.msra.mxu0 0
        %1302 = vmatpush.bf16.msra.mxu0 0
        %1303 = vmatpush.bf16.msra.mxu0 0
        %1304 = vmatpush.bf16.msra.mxu0 0
        %1305 = vmatpush.bf16.msra.mxu0 %v1296
        %1306 = vmatmul.bf16.gmra.mxu0 %v1292
        %v1307 = vpop.f32.mrf.mxu0
        %v1308 = vadd.f32 0.0, %v1307
        %v1309 = vpop.f32.mrf.mxu0
        %1310 = vdwg.mxu0
        %v1311 = vpack.c.bf16 %v1308, %v1308
        %1312 = vst [vmem:[#allocation2] sm:$0xf] %v1311
        %v1314 = vrot.slane %v1255, 4
        %v1317 = vrot.slane %v1250, 4
        %1319 = vmatpush.bf16.xpose.msra.mxu0 0
        %1320 = vmatpush.bf16.xpose.msra.mxu0 0
        %1321 = vmatpush.bf16.xpose.msra.mxu0 0
        %1322 = vmatpush.bf16.xpose.msra.mxu0 0
        %1323 = vmatpush.bf16.xpose.msra.mxu0 0
        %1324 = vmatpush.bf16.xpose.msra.mxu0 0
        %1325 = vmatpush.bf16.xpose.msra.mxu0 0
        %1326 = vmatpush.bf16.xpose.msra.mxu0 %v1317
        %1327 = vmatmul.bf16.gmra.mxu0 %v1314
        %v1328 = vpop.f32.mrf.mxu0
        %v1329 = vadd.f32 0.0, %v1328
        %v1330 = vpop.f32.mrf.mxu0
        %1331 = vdwg.mxu0
        %v1332 = vsel %vm1261, %v1329, -1e+32
        %v1333 = vsel %vm1277, %v1332, -inf
        %1334 = vmax.xlane.f32.xlu0 %v1333
        %v1335 = vpop.xlane.xlu0 %1334
        %v1336 = vsub.f32 %v1332, %v1335
        %v1337 = vmul.f32 %v1336, 1.442695
        %v1338 = vpow.pop %v1337
        %v1339 = vsel %vm1277, %v1338, 0.0
        %1340 = vadd.xlane.f32.xlu0 %v1339
        %v1341 = vpop.xlane.xlu0 %1340
        %v1342 = vrcp.pop %v1341
        %v1343 = vmul.f32 %v1338, %v1342
        %v1344 = vsel %vm1262, %v1343, 0.0
        %v1345 = vpack.c.bf16 %v1344, %v1344
        %v1347 = vrot.slane %v1256, 4
        %v1349 = vsel %vm1277, %v1345, 0
        %v1352 = vsel %vm1294, %v1347, 0
        %1354 = vmatpush.bf16.msra.mxu0 0
        %1355 = vmatpush.bf16.msra.mxu0 0
        %1356 = vmatpush.bf16.msra.mxu0 0
        %1357 = vmatpush.bf16.msra.mxu0 0
        %1358 = vmatpush.bf16.msra.mxu0 0
        %1359 = vmatpush.bf16.msra.mxu0 0
        %1360 = vmatpush.bf16.msra.mxu0 0
        %1361 = vmatpush.bf16.msra.mxu0 %v1352
        %1362 = vmatmul.bf16.gmra.mxu0 %v1349
        %v1363 = vpop.f32.mrf.mxu0
        %v1364 = vadd.f32 0.0, %v1363
        %v1365 = vpop.f32.mrf.mxu0
        %1366 = vdwg.mxu0
        %v1367 = vpack.c.bf16 %v1364, %v1364
        %1368 = vst [vmem:[#allocation2 + $0x4] sm:$0xf] %v1367
        %v1369 = vld [vmem:[#allocation2] sm:$0xff]
        %v1370 = vld [vmem:[%s815] sm:$0xf]
        %v1371 = vld [vmem:[%s815 + $0x4] sm:$0xf]
        %v1372 = vld [vmem:[%s815 + $0x8] sm:$0xf]
        %v1373 = vld [vmem:[%s815 + $0xc] sm:$0xf]
        %v1374 = vld [vmem:[%s815 + $0x10] sm:$0xf]
        %v1375 = vld [vmem:[%s815 + $0x14] sm:$0xf]
        %v1376 = vld [vmem:[%s815 + $0x18] sm:$0xf]
        %v1377 = vld [vmem:[%s815 + $0x1c] sm:$0xf]
        %v1378 = vld [vmem:[%s815 + $0x20] sm:$0xf]
        %v1379 = vld [vmem:[%s815 + $0x24] sm:$0xf]
        %v1380 = vld [vmem:[%s815 + $0x28] sm:$0xf]
        %v1381 = vld [vmem:[%s815 + $0x2c] sm:$0xf]
        %v1382 = vld [vmem:[%s815 + $0x30] sm:$0xf]
        %v1383 = vld [vmem:[%s815 + $0x34] sm:$0xf]
        %v1384 = vld [vmem:[%s815 + $0x38] sm:$0xf]
        %v1385 = vld [vmem:[%s815 + $0x3c] sm:$0xf]
        %v1386 = vld [vmem:[%s815 + $0x40] sm:$0xf]
        %v1387 = vld [vmem:[%s815 + $0x44] sm:$0xf]
        %v1388 = vld [vmem:[%s815 + $0x48] sm:$0xf]
        %v1389 = vld [vmem:[%s815 + $0x4c] sm:$0xf]
        %v1390 = vld [vmem:[%s815 + $0x50] sm:$0xf]
        %v1391 = vld [vmem:[%s815 + $0x54] sm:$0xf]
        %v1392 = vld [vmem:[%s815 + $0x58] sm:$0xf]
        %v1393 = vld [vmem:[%s815 + $0x5c] sm:$0xf]
        %v1394 = vld [vmem:[%s815 + $0x60] sm:$0xf]
        %v1395 = vld [vmem:[%s815 + $0x64] sm:$0xf]
        %v1396 = vld [vmem:[%s815 + $0x68] sm:$0xf]
        %v1397 = vld [vmem:[%s815 + $0x6c] sm:$0xf]
        %v1398 = vld [vmem:[%s815 + $0x70] sm:$0xf]
        %v1399 = vld [vmem:[%s815 + $0x74] sm:$0xf]
        %v1400 = vld [vmem:[%s815 + $0x78] sm:$0xf]
        %v1401 = vld [vmem:[%s815 + $0x7c] sm:$0xf]
        %v1402 = vld [vmem:[%s971] sm:$0x1]
        %v1404 = vperm.slane %v1402, 0
        %v1407 = vunpack.c.l.b16 %v1369
        %v1408 = vunpack.c.h.b16 %v1369
        %v1409 = vpack.c.b16 %v1407, %v1407
        %v1410 = vpack.c.b16 %v1408, %v1408
        %v1445 = vunpack.c.l.b16 %v1370
        %v1446 = vunpack.c.l.b16 %v1371
        %v1447 = vunpack.c.l.b16 %v1372
        %v1448 = vunpack.c.l.b16 %v1373
        %v1449 = vunpack.c.l.b16 %v1374
        %v1450 = vunpack.c.l.b16 %v1375
        %v1451 = vunpack.c.l.b16 %v1376
        %v1452 = vunpack.c.l.b16 %v1377
        %v1453 = vunpack.c.l.b16 %v1378
        %v1454 = vunpack.c.l.b16 %v1379
        %v1455 = vunpack.c.l.b16 %v1380
        %v1456 = vunpack.c.l.b16 %v1381
        %v1457 = vunpack.c.l.b16 %v1382
        %v1458 = vunpack.c.l.b16 %v1383
        %v1459 = vunpack.c.l.b16 %v1384
        %v1460 = vunpack.c.l.b16 %v1385
        %v1461 = vunpack.c.l.b16 %v1386
        %v1462 = vunpack.c.l.b16 %v1387
        %v1463 = vunpack.c.l.b16 %v1388
        %v1464 = vunpack.c.l.b16 %v1389
        %v1465 = vunpack.c.l.b16 %v1390
        %v1466 = vunpack.c.l.b16 %v1391
        %v1467 = vunpack.c.l.b16 %v1392
        %v1468 = vunpack.c.l.b16 %v1393
        %v1469 = vunpack.c.l.b16 %v1394
        %v1470 = vunpack.c.l.b16 %v1395
        %v1471 = vunpack.c.l.b16 %v1396
        %v1472 = vunpack.c.l.b16 %v1397
        %v1473 = vunpack.c.l.b16 %v1398
        %v1474 = vunpack.c.l.b16 %v1399
        %v1475 = vunpack.c.l.b16 %v1400
        %v1476 = vunpack.c.l.b16 %v1401
        %v1477 = vpack.c.b16 %v1446, %v1445
        %v1478 = vpack.c.b16 %v1448, %v1447
        %v1479 = vpack.c.b16 %v1450, %v1449
        %v1480 = vpack.c.b16 %v1452, %v1451
        %v1481 = vpack.c.b16 %v1454, %v1453
        %v1482 = vpack.c.b16 %v1456, %v1455
        %v1483 = vpack.c.b16 %v1458, %v1457
        %v1484 = vpack.c.b16 %v1460, %v1459
        %v1485 = vpack.c.b16 %v1462, %v1461
        %v1486 = vpack.c.b16 %v1464, %v1463
        %v1487 = vpack.c.b16 %v1466, %v1465
        %v1488 = vpack.c.b16 %v1468, %v1467
        %v1489 = vpack.c.b16 %v1470, %v1469
        %v1490 = vpack.c.b16 %v1472, %v1471
        %v1491 = vpack.c.b16 %v1474, %v1473
        %v1492 = vpack.c.b16 %v1476, %v1475
        %1509 = vmatpush.bf16.msra.mxu0 %v1484
        %1510 = vmatpush.bf16.msra.mxu0 %v1483
        %1511 = vmatpush.bf16.msra.mxu0 %v1482
        %1512 = vmatpush.bf16.msra.mxu0 %v1481
        %1513 = vmatpush.bf16.msra.mxu0 %v1480
        %1514 = vmatpush.bf16.msra.mxu0 %v1479
        %1515 = vmatpush.bf16.msra.mxu0 %v1478
        %1516 = vmatpush.bf16.msra.mxu0 %v1477
        %1517 = vmatmul.bf16.gmra.mxu0 %v1409
        %v1518 = vpop.f32.mrf.mxu0
        %v1519 = vadd.f32 %v1404, %v1518
        %v1520 = vpop.f32.mrf.mxu0
        %1521 = vdwg.mxu0
        %1522 = vmatpush.bf16.msra.mxu0 %v1492
        %1523 = vmatpush.bf16.msra.mxu0 %v1491
        %1524 = vmatpush.bf16.msra.mxu0 %v1490
        %1525 = vmatpush.bf16.msra.mxu0 %v1489
        %1526 = vmatpush.bf16.msra.mxu0 %v1488
        %1527 = vmatpush.bf16.msra.mxu0 %v1487
        %1528 = vmatpush.bf16.msra.mxu0 %v1486
        %1529 = vmatpush.bf16.msra.mxu0 %v1485
        %1530 = vmatmul.bf16.gmra.mxu0 %v1410
        %v1531 = vpop.f32.mrf.mxu0
        %v1532 = vadd.f32 %v1519, %v1531
        %v1533 = vpop.f32.mrf.mxu0
        %1534 = vdwg.mxu0
        %vm1535 = vcmp.lt.s32.totalorder %v1260, 32
        %v1536 = vadd.f32 %v993, %v1532
        %v1537 = vld [vmem:[%s824] sm:$0x1]
        %v1538 = vld [vmem:[%s974] sm:$0x1]
        %1539 = vadd.xlane.f32.xlu0 %v1536
        %v1540 = vpop.xlane.xlu0 %1539
        %v1541 = vmul.f32 %v1540, 0.03125
        %v1542 = vsub.f32 %v1536, %v1541
        %v1543 = vsel %vm1535, 1, 0
        %vm1544 = vcmp.eq.s32.totalorder %v1543, 1
        %v1545 = vsel %vm1544, %v1542, 0.0
        %v1546 = vmul.f32 %v1545, %v1545
        %1547 = vadd.xlane.f32.xlu0 %v1546
        %v1548 = vpop.xlane.xlu0 %1547
        %v1549 = vmul.f32 %v1548, 0.03125
        %v1550 = vadd.f32 %v1549, 1e-05
        %v1551 = vrsqrt.pop %v1550
        %v1552 = vmul.f32 %v1551, %v1550
        %v1553 = vmul.f32 %v1552, %v1551
        %v1554 = vmul.f32 0.5, %v1553
        %v1555 = vsub.f32 1.5, %v1554
        %v1556 = vmul.f32 %v1551, %v1555
        %vm1557 = vweird.f32 %v1550
        %vm1558 = vweird.f32 %v1551
        %vm1559 = vmor %vm1557, %vm1558
        %v1560 = vsel %vm1559, %v1551, %v1556
        %v1561 = vmul.f32 %v1545, %v1560
        %v1563 = vperm.slane %v1537, 0
        %v1565 = vmul.f32 %v1561, %v1563
        %v1567 = vperm.slane %v1538, 0
        %v1569 = vadd.f32 %v1565, %v1567
        %v1570 = vpack.c.bf16 %v1569, %v1569
        %v1571 = vld [vmem:[%s834] sm:$0xf]
        %v1572 = vld [vmem:[%s834 + $0x4] sm:$0xf]
        %v1573 = vld [vmem:[%s834 + $0x8] sm:$0xf]
        %v1574 = vld [vmem:[%s834 + $0xc] sm:$0xf]
        %v1575 = vld [vmem:[%s834 + $0x10] sm:$0xf]
        %v1576 = vld [vmem:[%s834 + $0x14] sm:$0xf]
        %v1577 = vld [vmem:[%s834 + $0x18] sm:$0xf]
        %v1578 = vld [vmem:[%s834 + $0x1c] sm:$0xf]
        %v1579 = vld [vmem:[%s834 + $0x20] sm:$0xf]
        %v1580 = vld [vmem:[%s834 + $0x24] sm:$0xf]
        %v1581 = vld [vmem:[%s834 + $0x28] sm:$0xf]
        %v1582 = vld [vmem:[%s834 + $0x2c] sm:$0xf]
        %v1583 = vld [vmem:[%s834 + $0x30] sm:$0xf]
        %v1584 = vld [vmem:[%s834 + $0x34] sm:$0xf]
        %v1585 = vld [vmem:[%s834 + $0x38] sm:$0xf]
        %v1586 = vld [vmem:[%s834 + $0x3c] sm:$0xf]
        %v1587 = vld [vmem:[%s977] sm:$0x1]
        %v1589 = vperm.slane %v1587, 0
        %v1607 = vunpack.c.l.b16 %v1571
        %v1608 = vunpack.c.l.b16 %v1572
        %v1609 = vunpack.c.l.b16 %v1573
        %v1610 = vunpack.c.l.b16 %v1574
        %v1611 = vunpack.c.l.b16 %v1575
        %v1612 = vunpack.c.l.b16 %v1576
        %v1613 = vunpack.c.l.b16 %v1577
        %v1614 = vunpack.c.l.b16 %v1578
        %v1615 = vunpack.c.l.b16 %v1579
        %v1616 = vunpack.c.l.b16 %v1580
        %v1617 = vunpack.c.l.b16 %v1581
        %v1618 = vunpack.c.l.b16 %v1582
        %v1619 = vunpack.c.l.b16 %v1583
        %v1620 = vunpack.c.l.b16 %v1584
        %v1621 = vunpack.c.l.b16 %v1585
        %v1622 = vunpack.c.l.b16 %v1586
        %v1623 = vpack.c.b16 %v1608, %v1607
        %v1624 = vpack.c.b16 %v1610, %v1609
        %v1625 = vpack.c.b16 %v1612, %v1611
        %v1626 = vpack.c.b16 %v1614, %v1613
        %v1627 = vpack.c.b16 %v1616, %v1615
        %v1628 = vpack.c.b16 %v1618, %v1617
        %v1629 = vpack.c.b16 %v1620, %v1619
        %v1630 = vpack.c.b16 %v1622, %v1621
        %1639 = vmatpush.bf16.msra.mxu0 %v1630
        %1640 = vmatpush.bf16.msra.mxu0 %v1629
        %1641 = vmatpush.bf16.msra.mxu0 %v1628
        %1642 = vmatpush.bf16.msra.mxu0 %v1627
        %1643 = vmatpush.bf16.msra.mxu0 %v1626
        %1644 = vmatpush.bf16.msra.mxu0 %v1625
        %1645 = vmatpush.bf16.msra.mxu0 %v1624
        %1646 = vmatpush.bf16.msra.mxu0 %v1623
        %1647 = vmatmul.bf16.gmra.mxu0 %v1570
        %v1648 = vpop.f32.mrf.mxu0
        %v1649 = vadd.f32 %v1589, %v1648
        %v1650 = vpop.f32.mrf.mxu0
        %1651 = vdwg.mxu0
        %v1652 = vmax.f32 %v1649, 0.0
        %v1653 = vpack.c.bf16 %v1652, %v1652
        %v1654 = vld [vmem:[%s844] sm:$0xf]
        %v1655 = vld [vmem:[%s844 + $0x4] sm:$0xf]
        %v1656 = vld [vmem:[%s844 + $0x8] sm:$0xf]
        %v1657 = vld [vmem:[%s844 + $0xc] sm:$0xf]
        %v1658 = vld [vmem:[%s844 + $0x10] sm:$0xf]
        %v1659 = vld [vmem:[%s844 + $0x14] sm:$0xf]
        %v1660 = vld [vmem:[%s844 + $0x18] sm:$0xf]
        %v1661 = vld [vmem:[%s844 + $0x1c] sm:$0xf]
        %v1662 = vld [vmem:[%s844 + $0x20] sm:$0xf]
        %v1663 = vld [vmem:[%s844 + $0x24] sm:$0xf]
        %v1664 = vld [vmem:[%s844 + $0x28] sm:$0xf]
        %v1665 = vld [vmem:[%s844 + $0x2c] sm:$0xf]
        %v1666 = vld [vmem:[%s844 + $0x30] sm:$0xf]
        %v1667 = vld [vmem:[%s844 + $0x34] sm:$0xf]
        %v1668 = vld [vmem:[%s844 + $0x38] sm:$0xf]
        %v1669 = vld [vmem:[%s844 + $0x3c] sm:$0xf]
        %v1670 = vld [vmem:[%s980] sm:$0x1]
        %v1672 = vperm.slane %v1670, 0
        %v1690 = vunpack.c.l.b16 %v1654
        %v1691 = vunpack.c.l.b16 %v1655
        %v1692 = vunpack.c.l.b16 %v1656
        %v1693 = vunpack.c.l.b16 %v1657
        %v1694 = vunpack.c.l.b16 %v1658
        %v1695 = vunpack.c.l.b16 %v1659
        %v1696 = vunpack.c.l.b16 %v1660
        %v1697 = vunpack.c.l.b16 %v1661
        %v1698 = vunpack.c.l.b16 %v1662
        %v1699 = vunpack.c.l.b16 %v1663
        %v1700 = vunpack.c.l.b16 %v1664
        %v1701 = vunpack.c.l.b16 %v1665
        %v1702 = vunpack.c.l.b16 %v1666
        %v1703 = vunpack.c.l.b16 %v1667
        %v1704 = vunpack.c.l.b16 %v1668
        %v1705 = vunpack.c.l.b16 %v1669
        %v1706 = vpack.c.b16 %v1691, %v1690
        %v1707 = vpack.c.b16 %v1693, %v1692
        %v1708 = vpack.c.b16 %v1695, %v1694
        %v1709 = vpack.c.b16 %v1697, %v1696
        %v1710 = vpack.c.b16 %v1699, %v1698
        %v1711 = vpack.c.b16 %v1701, %v1700
        %v1712 = vpack.c.b16 %v1703, %v1702
        %v1713 = vpack.c.b16 %v1705, %v1704
        %1722 = vmatpush.bf16.msra.mxu0 %v1713
        %1723 = vmatpush.bf16.msra.mxu0 %v1712
        %1724 = vmatpush.bf16.msra.mxu0 %v1711
        %1725 = vmatpush.bf16.msra.mxu0 %v1710
        %1726 = vmatpush.bf16.msra.mxu0 %v1709
        %1727 = vmatpush.bf16.msra.mxu0 %v1708
        %1728 = vmatpush.bf16.msra.mxu0 %v1707
        %1729 = vmatpush.bf16.msra.mxu0 %v1706
        %1730 = vmatmul.bf16.gmra.mxu0 %v1653
        %v1731 = vpop.f32.mrf.mxu0
        %v1732 = vadd.f32 %v1672, %v1731
        %v1733 = vpop.f32.mrf.mxu0
        %1734 = vdwg.mxu0
        %v1735 = vadd.f32 %v1569, %v1732
        %v1736 = vld [vmem:[%s853] sm:$0x1]
        %v1737 = vld [vmem:[%s983] sm:$0x1]
        %1738 = vadd.xlane.f32.xlu0 %v1735
        %v1739 = vpop.xlane.xlu0 %1738
        %v1740 = vmul.f32 %v1739, 0.03125
        %v1741 = vsub.f32 %v1735, %v1740
        %v1742 = vsel %vm1544, %v1741, 0.0
        %v1743 = vmul.f32 %v1742, %v1742
        %1744 = vadd.xlane.f32.xlu0 %v1743
        %v1745 = vpop.xlane.xlu0 %1744
        %v1746 = vmul.f32 %v1745, 0.03125
        %v1747 = vadd.f32 %v1746, 1e-05
        %v1748 = vrsqrt.pop %v1747
        %v1749 = vmul.f32 %v1748, %v1747
        %v1750 = vmul.f32 %v1749, %v1748
        %v1751 = vmul.f32 0.5, %v1750
        %v1752 = vsub.f32 1.5, %v1751
        %v1753 = vmul.f32 %v1748, %v1752
        %vm1754 = vweird.f32 %v1747
        %vm1755 = vweird.f32 %v1748
        %vm1756 = vmor %vm1754, %vm1755
        %v1757 = vsel %vm1756, %v1748, %v1753
        %v1758 = vmul.f32 %v1742, %v1757
        %v1760 = vperm.slane %v1736, 0
        %v1762 = vmul.f32 %v1758, %v1760
        %v1764 = vperm.slane %v1737, 0
        %v1766 = vadd.f32 %v1762, %v1764
        %v1767 = vpack.c.bf16 %v1766, %v1766
        %1768 = vst [vmem:[%s964] sm:$0xf] %v1767
        %s1769 = sand.u32 %s484, 1
        %s1770 = scalar_lea.sflag [#allocation5], %s1769
        %s1771 = sand.u32 %s484, 1
        %s1772 = smul.addr %s1771, 4
        %s1773 = scalar_lea.vmem [#allocation20], %s1772
        // Predicated region
        $region129: #{tpu_custom_call.1} parent=83 // pred_check
          %p1774 = pneg %p494
        $region130: #{tpu_custom_call.1} parent=83 // pred_check_branch
          %1776 = sbr.rel (%p1774) target = $region132
        $region131: #{tpu_custom_call.1} parent=83 // pred_region
          %1778 = vsyncadd %s1770, 0
          %s1779 = smul.addr %s52, 4
          %s1780 = scalar_lea.hbm %s16, %s1779
          %s1782 = sshll.u32 %s1773, 4
          %s1783 = int_to_ptr.vmem [resolvable:$true] %s1782
          %s1784 = sshll.u32 %s1780, 4
          %s1785 = int_to_ptr.hbm [resolvable:$true] %s1784
          %1787 = dma.vmem_to_hbm [thread:$0]  %s1783, 64, %s1785, %s1770
        $region132: #{tpu_custom_call.1} parent=83 // pred_fallthru
          _
      $region84: #{tpu_custom_call.1} parent=5 // pred_fallthru
        _
      %p1788 = scmp.le.s32.totalorder 2, %s43
      // Predicated region
      $region133: #{tpu_custom_call.1} parent=5 // pred_check
        %p1789 = pneg %p1788
      $region134: #{tpu_custom_call.1} parent=5 // pred_check_branch
        %1791 = sbr.rel (%p1789) target = $region136
      $region135: #{tpu_custom_call.1} parent=5 // pred_region
        %s1792 = ssub.s32 %s43, 2
        // Predicated region
        $region137: #{tpu_custom_call.1} parent=135 // pred_check
          %p1793 = pneg %p500
        $region138: #{tpu_custom_call.1} parent=135 // pred_check_branch
          %1795 = sbr.rel (%p1793) target = $region140
        $region139: #{tpu_custom_call.1} parent=135 // pred_region
          %s1796 = sand.u32 %s485, 1
          %s1797 = scalar_lea.sflag [#allocation5], %s1796
          %s1798 = sand.u32 %s485, 1
          %s1799 = smul.addr %s1798, 4
          %s1800 = scalar_lea.vmem [#allocation20], %s1799
          %1802 = dma.done %s1797, 64
        $region140: #{tpu_custom_call.1} parent=135 // pred_fallthru
          _
      $region136: #{tpu_custom_call.1} parent=5 // pred_fallthru
        _
    $region6: #{tpu_custom_call.1} parent=1 // loop_footer
      %s47 = sadd.s32 1, %s43
    $region7: #{tpu_custom_call.1} parent=1 // loop_footer_branch
      %42 = sbr.rel target = $region3
    $region8: #{tpu_custom_call.1} parent=1 // loop_exit
      _
    %1803 = vsyncpa [#allocation4], 1
    %s1804 = scalar_lea.sflag [#allocation4], 1
    %1805 = vsyncpa %s1804, 1
    %1806 = vsyncpa [#allocation7], 1
    %s1807 = scalar_lea.sflag [#allocation7], 1
    %1808 = vsyncpa %s1807, 1
    %1809 = vsyncpa [#allocation10], 1
    %s1810 = scalar_lea.sflag [#allocation10], 1
    %1811 = vsyncpa %s1810, 1
    %1812 = vsyncpa [#allocation13], 1
    %s1813 = scalar_lea.sflag [#allocation13], 1
    %1814 = vsyncpa %s1813, 1
    %1815 = vsyncpa [#allocation16], 1
    %s1816 = scalar_lea.sflag [#allocation16], 1
    %1817 = vsyncpa %s1816, 1
    %1818 = vsyncpa [#allocation19], 1
    %s1819 = scalar_lea.sflag [#allocation19], 1
    %1820 = vsyncpa %s1819, 1
    %1821 = vsyncpa [#allocation5], 1
    %s1822 = scalar_lea.sflag [#allocation5], 1
    %1823 = vsyncpa %s1822, 1

</llo_original>
